<compile_context>
chip_gen: v5e
topology: v5e:2x2
jax: 0.10.0
libtpu: 0.0.40
codegen_flags: <defaults>
</compile_context>

<pallas_src>
import functools

import jax
import jax.numpy as jnp
from jax import lax
from jax.experimental import pallas as pl
from jax.experimental.pallas import tpu as pltpu

_EPS = 1e-5


# ----------------------------- Pallas kernels ------------------------------

def _planar_conv_kernel(x_ref, w_ref, b_ref, o_ref, *, offsets, out_len):
    """Fused (Conv + folded BN) GEMM + bias + ReLU for one sample.

    x_ref : (1, Cin, Lp)   padded, spatially-flattened input (f32 or bf16)
    w_ref : (Cout, T*Cin)  folded weight, bf16, K ordered (tap, cin)
    b_ref : (Cout, 1)      folded bias, f32
    o_ref : (1, Cout, Lo)  lane-dense output (Lo in lanes)
    offsets: static start offsets of the T tap windows inside Lp.
    """
    x = x_ref[0].astype(jnp.float32)                     # (Cin, Lp)
    cols = [x[:, off:off + out_len] for off in offsets]  # T x (Cin, Lo), static
    xcol = cols[0] if len(cols) == 1 else jnp.concatenate(cols, axis=0)
    xcol = xcol.astype(jnp.bfloat16)                     # bf16 MXU operand
    acc = jnp.dot(w_ref[...], xcol, preferred_element_type=jnp.float32)
    y = jnp.maximum(acc + b_ref[...], 0.0)               # f32 epilogue
    o_ref[0] = y.astype(o_ref.dtype)


def _planar_maxpool_kernel(x_ref, o_ref, *, offsets, out_len):
    """Running max over the 9 pooling taps (contiguous slices of one sample)."""
    x = x_ref[0]                                         # (C, Lp)
    acc = x[:, offsets[0]:offsets[0] + out_len]
    for off in offsets[1:]:
        acc = jnp.maximum(acc, x[:, off:off + out_len])
    o_ref[0] = acc


# --------------------------- pallas_call wrappers ---------------------------

def _vmem_budget_bytes():
    try:
        cap = pltpu.get_tpu_info().vmem_capacity_bytes   # 64 MiB on v7x, 128 on v5e/v6e
    except Exception:
        cap = 64 * 1024 * 1024
    return max(cap // 4, 4 * 1024 * 1024)                # leave headroom for buffers


def planar_conv(x_planar, eff_w, eff_b, offsets, out_len, out_dtype):
    """x_planar: (N, Cin, Lp); eff_w: (Cout, T*Cin) bf16; eff_b: (Cout,) f32."""
    n, cin, lp = x_planar.shape
    cout, k = eff_w.shape
    t = len(offsets)
    assert k == t * cin, (k, t, cin)

    # Per-grid-step VMEM estimate (double-buffered blocks + weights + scratch).
    step_bytes = (2 * cin * lp * x_planar.dtype.itemsize
                  + 2 * cout * out_len * jnp.dtype(out_dtype).itemsize
                  + cout * k * 2 + cout * 4
                  + t * cin * out_len * 6 + cout * out_len * 4)
    assert step_bytes <= _vmem_budget_bytes(), (
        "per-step working set exceeds the VMEM budget; also tile L")
    # TODO(synk): for production channel counts add K-axis tiling with a VMEM
    # f32 accumulator (K as last, 'arbitrary' grid axis) instead of whole-K blocks.

    kernel = functools.partial(_planar_conv_kernel,
                               offsets=tuple(int(o) for o in offsets),
                               out_len=int(out_len))
    return pl.pallas_call(
        kernel,
        out_shape=jax.ShapeDtypeStruct((n, cout, out_len), out_dtype),
        grid=(n,),
        in_specs=[
            pl.BlockSpec((1, cin, lp), lambda g: (g, 0, 0)),
            pl.BlockSpec((cout, k), lambda g: (0, 0)),
            pl.BlockSpec((cout, 1), lambda g: (0, 0)),
        ],
        out_specs=pl.BlockSpec((1, cout, out_len), lambda g: (g, 0, 0)),
        compiler_params=pltpu.CompilerParams(
            dimension_semantics=("parallel",)),
    )(x_planar, eff_w, eff_b.reshape(cout, 1))


def planar_maxpool(x_planar, offsets, out_len):
    n, c, lp = x_planar.shape
    kernel = functools.partial(_planar_maxpool_kernel,
                               offsets=tuple(int(o) for o in offsets),
                               out_len=int(out_len))
    return pl.pallas_call(
        kernel,
        out_shape=jax.ShapeDtypeStruct((n, c, out_len), x_planar.dtype),
        grid=(n,),
        in_specs=[pl.BlockSpec((1, c, lp), lambda g: (g, 0, 0))],
        out_specs=pl.BlockSpec((1, c, out_len), lambda g: (g, 0, 0)),
        compiler_params=pltpu.CompilerParams(
            dimension_semantics=("parallel",)),
    )(x_planar)


# ------------------- glue: padding / parity-plane flattening -----------------

def _parity_flatten(xp):
    """(N, C, He, We), He/We even -> (N, C, 4*He/2*We/2); planes ordered (row-parity, col-parity)."""
    n, c, hp, wp = xp.shape
    hh, ww = hp // 2, wp // 2
    tns = xp.reshape(n, c, hh, 2, ww, 2).transpose(0, 1, 3, 5, 2, 4)
    return tns.reshape(n, c, 4 * hh * ww), hh, ww


def _stride2_tap_offsets(hh, ww):
    plane = hh * ww
    return tuple((2 * (ky & 1) + (kx & 1)) * plane + (ky // 2) * ww + (kx // 2)
                 for ky in range(3) for kx in range(3))


def conv3x3_block_s1(x_nchw, eff_w, eff_b, out_dtype):
    """3x3, stride 1, pad 1, + folded BN + ReLU."""
    n, c, h, w = x_nchw.shape
    # one extra bottom pad row so every tap window stays in bounds for all
    # (including junk-column) positions of the flattened layout
    xp = jnp.pad(x_nchw, ((0, 0), (0, 0), (1, 2), (1, 1)))
    hp, wp = h + 3, w + 2
    flat = xp.reshape(n, c, hp * wp)
    offsets = tuple(ky * wp + kx for ky in range(3) for kx in range(3))
    out = planar_conv(flat, eff_w, eff_b, offsets, out_len=h * wp,
                      out_dtype=out_dtype)
    return out.reshape(n, -1, h, wp)[:, :, :, :w]        # drop junk columns


def conv3x3_block_s2(x_nchw, eff_w, eff_b, out_dtype):
    """3x3, stride 2, pad 1, + folded BN + ReLU (via parity-plane gather)."""
    n, c, h, w = x_nchw.shape
    ho = (h - 1) // 2 + 1
    wo = (w - 1) // 2 + 1
    pad_b = 1 + ((h + 2) & 1)                            # keep padded dims even
    pad_r = 1 + ((w + 2) & 1)
    xp = jnp.pad(x_nchw, ((0, 0), (0, 0), (1, pad_b), (1, pad_r)))
    flat, hh, ww = _parity_flatten(xp)
    offsets = _stride2_tap_offsets(hh, ww)
    out = planar_conv(flat, eff_w, eff_b, offsets, out_len=ho * ww,
                      out_dtype=out_dtype)
    return out.reshape(n, -1, ho, ww)[:, :, :, :wo]


def maxpool3x3_s2_ceil(x_nchw):
    """MaxPool2d(kernel=3, stride=2, padding=0, ceil_mode=True)."""
    n, c, h, w = x_nchw.shape
    ho = -(-(h - 3) // 2) + 1
    wo = -(-(w - 3) // 2) + 1
    need_h = 2 * (ho - 1) + 3
    need_w = 2 * (wo - 1) + 3
    hp = need_h + (need_h & 1)
    wp = need_w + (need_w & 1)
    xq = jnp.pad(x_nchw, ((0, 0), (0, 0), (0, hp - h), (0, wp - w)),
                 constant_values=-jnp.inf)
    flat, hh, ww = _parity_flatten(xq)
    offsets = _stride2_tap_offsets(hh, ww)
    out = planar_maxpool(flat, offsets, out_len=ho * ww)
    return out.reshape(n, c, ho, ww)[:, :, :, :wo]


# ----------------------- parameters (Conv + BN folding) ---------------------

def make_conv_params(key, cin, cout, k):
    k1, k2, k3, k4, k5, k6 = jax.random.split(key, 6)
    return dict(
        W=jax.random.normal(k1, (cout, cin, k, k), jnp.float32)
          / jnp.sqrt(float(cin * k * k)),
        b=0.1 * jax.random.normal(k2, (cout,), jnp.float32),
        gamma=1.0 + 0.1 * jax.random.normal(k3, (cout,), jnp.float32),
        beta=0.1 * jax.random.normal(k4, (cout,), jnp.float32),
        mean=0.1 * jax.random.normal(k5, (cout,), jnp.float32),
        var=jax.random.uniform(k6, (cout,), jnp.float32, 0.5, 1.5),
    )


def fold_conv_bn(p):
    """Fold conv bias + eval-mode BN into an effective (Cout, K) weight/bias.

    K is ordered (ky, kx, cin) to match the in-kernel tap gather.  Weight is
    stored in bf16 (MXU operand), bias stays f32 (f32 epilogue).
    """
    scale = p["gamma"] / jnp.sqrt(p["var"] + _EPS)
    cout, cin, kh, kw = p["W"].shape
    w2d = p["W"].transpose(0, 2, 3, 1).reshape(cout, kh * kw * cin)
    eff_w = (w2d * scale[:, None]).astype(jnp.bfloat16)
    eff_b = (p["b"] - p["mean"]) * scale + p["beta"]
    return eff_w, eff_b


# ----------------------------- ReductionBlock -------------------------------

def reduction_block_forward(x_nchw, folded):
    n, c, h, w = x_nchw.shape

    # branch1.conv1 + branch2.conv1 share the input -> single fused 1x1 GEMM.
    w11 = jnp.concatenate([folded["b1_conv1"][0], folded["b2_conv1"][0]], axis=0)
    b11 = jnp.concatenate([folded["b1_conv1"][1], folded["b2_conv1"][1]], axis=0)
    c1 = folded["b1_conv1"][0].shape[0]

    x_planar = x_nchw.reshape(n, c, h * w)
    y11 = planar_conv(x_planar, w11, b11, offsets=(0,), out_len=h * w,
                      out_dtype=jnp.bfloat16)            # (N, c1+c2, H*W), bf16
    b1_mid = y11[:, :c1, :].reshape(n, c1, h, w)
    b2_mid = y11[:, c1:, :].reshape(n, -1, h, w)

    # branch1: 1x1 -> 3x3 stride 2
    b1_out = conv3x3_block_s2(b1_mid, *folded["b1_conv2"], out_dtype=jnp.float32)
    # branch2: 1x1 -> 3x3 -> 3x3 stride 2
    b2_mid2 = conv3x3_block_s1(b2_mid, *folded["b2_conv2"], out_dtype=jnp.bfloat16)
    b2_out = conv3x3_block_s2(b2_mid2, *folded["b2_conv3"], out_dtype=jnp.float32)
    # branch3: MaxPool2d(3, stride=2, ceil_mode=True)
    b3_out = maxpool3x3_s2_ceil(x_nchw)

    # The planar layout is already NCHW, so no final transpose is needed.
    # TODO(synk): the three branch outputs could be written into channel
    # slices of one pre-allocated buffer via input_output_aliases to drop
    # this concat; at these sizes the concat is negligible.
    return jnp.concatenate([b1_out, b2_out, b3_out], axis=1)


# ------------------------------ references ----------------------------------

def _conv_bn_relu_ref(x, p, stride, pad):
    y = lax.conv_general_dilated(
        x, p["W"], (stride, stride), [(pad, pad), (pad, pad)],
        dimension_numbers=("NCHW", "OIHW", "NCHW"),
        precision=lax.Precision.HIGHEST)
    y = y + p["b"][None, :, None, None]
    y = (p["gamma"][None, :, None, None]
         * (y - p["mean"][None, :, None, None])
         / jnp.sqrt(p["var"][None, :, None, None] + _EPS)
         + p["beta"][None, :, None, None])
    return jnp.maximum(y, 0.0)


def reduction_block_reference_f32(x, raw):
    b1 = _conv_bn_relu_ref(x, raw["b1_conv1"], 1, 0)
    b1 = _conv_bn_relu_ref(b1, raw["b1_conv2"], 2, 1)
    b2 = _conv_bn_relu_ref(x, raw["b2_conv1"], 1, 0)
    b2 = _conv_bn_relu_ref(b2, raw["b2_conv2"], 1, 1)
    b2 = _conv_bn_relu_ref(b2, raw["b2_conv3"], 2, 1)
    b3 = lax.reduce_window(x, -jnp.inf, lax.max, (1, 1, 3, 3), (1, 1, 2, 2),
                           [(0, 0), (0, 0), (0, 1), (0, 1)])
    return jnp.concatenate([b1, b2, b3], axis=1)


def _folded_conv_ref(x, eff_w, eff_b, ksize, stride, pad):
    # Same math as the Pallas kernel (bf16 operands, f32 accumulate), computed
    # with lax.conv -> tight check of the gather / layout / offset logic.
    cout, k = eff_w.shape
    cin = k // (ksize * ksize)
    w4 = eff_w.astype(jnp.float32).reshape(cout, ksize, ksize, cin)
    w4 = w4.transpose(0, 3, 1, 2)                        # OIHW
    xr = x.astype(jnp.bfloat16).astype(jnp.float32)
    y = lax.conv_general_dilated(
        xr, w4, (stride, stride), [(pad, pad), (pad, pad)],
        dimension_numbers=("NCHW", "OIHW", "NCHW"),
        precision=lax.Precision.HIGHEST)
    return jnp.maximum(y + eff_b.reshape(1, cout, 1, 1), 0.0)


def reduction_block_reference_bf16(x, folded):
    b1 = _folded_conv_ref(x, *folded["b1_conv1"], 1, 1, 0)
    b1 = _folded_conv_ref(b1, *folded["b1_conv2"], 3, 2, 1)
    b2 = _folded_conv_ref(x, *folded["b2_conv1"], 1, 1, 0)
    b2 = _folded_conv_ref(b2, *folded["b2_conv2"], 3, 1, 1)
    b2 = _folded_conv_ref(b2, *folded["b2_conv3"], 3, 2, 1)
    b3 = lax.reduce_window(x, -jnp.inf, lax.max, (1, 1, 3, 3), (1, 1, 2, 2),
                           [(0, 0), (0, 0), (0, 1), (0, 1)])
    return jnp.concatenate([b1, b2, b3], axis=1)


# ----------------------------------- main ------------------------------------

if __name__ == "__main__":
    # ReductionBlock(in_channels=8, mid1=[8, 8], mid2=[4, 16, 16, 4])
    in_channels = 8
    mid1 = [8, 8]
    mid2 = [4, 16, 16, 4]
    N, H, W = 2, 16, 16

    key = jax.random.PRNGKey(0)
    kx, k1, k2, k3, k4, k5 = jax.random.split(key, 6)
    x = jax.random.normal(kx, (N, in_channels, H, W), jnp.float32)   # NCHW

    raw = {
        "b1_conv1": make_conv_params(k1, in_channels, mid1[0], 1),
        "b1_conv2": make_conv_params(k2, mid1[0], mid2[1], 3),
        "b2_conv1": make_conv_params(k3, in_channels, mid1[1], 1),
        "b2_conv2": make_conv_params(k4, mid1[1], mid2[2], 3),
        "b2_conv3": make_conv_params(k5, mid2[2], mid2[2], 3),
    }
    folded = {name: fold_conv_bn(p) for name, p in raw.items()}

    fwd = jax.jit(reduction_block_forward)
    out = jax.block_until_ready(fwd(x, folded))

    ref_bf16 = jax.block_until_ready(reduction_block_reference_bf16(x, folded))
    ref_f32 = jax.block_until_ready(reduction_block_reference_f32(x, raw))

    assert out.shape == (N, mid2[1] + mid2[2] + in_channels, 8, 8), out.shape
    # tight: reference with the same bf16-rounded operands as the kernel
    assert jnp.allclose(out, ref_bf16, atol=1e-2, rtol=1e-2), float(
        jnp.max(jnp.abs(out - ref_bf16)))
    # loose: unfolded full-f32 reference (allows bf16 MXU rounding noise)
    assert jnp.allclose(out, ref_f32, atol=1e-1, rtol=5e-2), float(
        jnp.max(jnp.abs(out - ref_f32)))

    print("KERNEL_OK")
</pallas_src>

<mosaic_0001>
module attributes {stable_mosaic.version = 11 : i64} {
  func.func @_planar_maxpool_kernel(%arg0: i32, %arg1: memref<1x8x324xf32, #tpu.memory_space<vmem>>, %arg2: memref<1x8x72xf32, #tpu.memory_space<vmem>>) attributes {dimension_semantics = [#tpu.dimension_semantics<parallel>], iteration_bounds = array<i64: 2>, scalar_prefetch = 0 : i64, scratch_operands = 0 : i64, tpu.core_type = #tpu.core_type<tc>, window_params = [{transform_indices = @transform_0, window_bounds = array<i64: 1, 8, 324>}, {transform_indices = @transform_1, window_bounds = array<i64: 1, 8, 72>}]} {
    %c0 = arith.constant 0 : index
    %c0_0 = arith.constant 0 : index
    %c0_1 = arith.constant 0 : index
    %0 = vector.load %arg1[%c0, %c0_0, %c0_1] : memref<1x8x324xf32, #tpu.memory_space<vmem>>, vector<1x8x324xf32>
    %1 = vector.shape_cast %0 : vector<1x8x324xf32> to vector<8x324xf32>
    %2 = vector.extract_strided_slice %1 {offsets = [0, 0], sizes = [8, 72], strides = [1, 1]} : vector<8x324xf32> to vector<8x72xf32>
    %3 = vector.extract_strided_slice %1 {offsets = [0, 81], sizes = [8, 72], strides = [1, 1]} : vector<8x324xf32> to vector<8x72xf32>
    %4 = arith.maximumf %2, %3 : vector<8x72xf32>
    %5 = vector.extract_strided_slice %1 {offsets = [0, 1], sizes = [8, 72], strides = [1, 1]} : vector<8x324xf32> to vector<8x72xf32>
    %6 = arith.maximumf %4, %5 : vector<8x72xf32>
    %7 = vector.extract_strided_slice %1 {offsets = [0, 162], sizes = [8, 72], strides = [1, 1]} : vector<8x324xf32> to vector<8x72xf32>
    %8 = arith.maximumf %6, %7 : vector<8x72xf32>
    %9 = vector.extract_strided_slice %1 {offsets = [0, 243], sizes = [8, 72], strides = [1, 1]} : vector<8x324xf32> to vector<8x72xf32>
    %10 = arith.maximumf %8, %9 : vector<8x72xf32>
    %11 = vector.extract_strided_slice %1 {offsets = [0, 163], sizes = [8, 72], strides = [1, 1]} : vector<8x324xf32> to vector<8x72xf32>
    %12 = arith.maximumf %10, %11 : vector<8x72xf32>
    %13 = vector.extract_strided_slice %1 {offsets = [0, 9], sizes = [8, 72], strides = [1, 1]} : vector<8x324xf32> to vector<8x72xf32>
    %14 = arith.maximumf %12, %13 : vector<8x72xf32>
    %15 = vector.extract_strided_slice %1 {offsets = [0, 90], sizes = [8, 72], strides = [1, 1]} : vector<8x324xf32> to vector<8x72xf32>
    %16 = arith.maximumf %14, %15 : vector<8x72xf32>
    %17 = vector.extract_strided_slice %1 {offsets = [0, 10], sizes = [8, 72], strides = [1, 1]} : vector<8x324xf32> to vector<8x72xf32>
    %18 = arith.maximumf %16, %17 : vector<8x72xf32>
    %c0_2 = arith.constant 0 : index
    %c0_3 = arith.constant 0 : index
    %c0_4 = arith.constant 0 : index
    %19 = vector.load %arg2[%c0_2, %c0_3, %c0_4] : memref<1x8x72xf32, #tpu.memory_space<vmem>>, vector<1x8x72xf32>
    %20 = vector.shape_cast %19 : vector<1x8x72xf32> to vector<8x72xf32>
    %21 = vector.shape_cast %18 : vector<8x72xf32> to vector<1x8x72xf32>
    tpu.vector_store %arg2[%c0_2, %c0_3, %c0_4], %21 {strides = array<i32>} : memref<1x8x72xf32, #tpu.memory_space<vmem>>, vector<1x8x72xf32>,
    return
  }
  func.func @transform_0(%arg0: i32) -> (i32, i32, i32) {
    %c0_i32 = arith.constant 0 : i32
    %c0_i32_0 = arith.constant 0 : i32
    %c0_i32_1 = arith.constant 0 : i32
    return %arg0, %c0_i32, %c0_i32_0 : i32, i32, i32
  }
  func.func @transform_1(%arg0: i32) -> (i32, i32, i32) {
    %c0_i32 = arith.constant 0 : i32
    %c0_i32_0 = arith.constant 0 : i32
    %c0_i32_1 = arith.constant 0 : i32
    return %arg0, %c0_i32, %c0_i32_0 : i32, i32, i32
  }
}

module attributes {stable_mosaic.version = 11 : i64} {
  func.func @_planar_conv_kernel(%arg0: i32, %arg1: memref<1x8x256xf32, #tpu.memory_space<vmem>>, %arg2: memref<16x8xbf16, #tpu.memory_space<vmem>>, %arg3: memref<16x1xf32, #tpu.memory_space<vmem>>, %arg4: memref<1x16x256xbf16, #tpu.memory_space<vmem>>) attributes {dimension_semantics = [#tpu.dimension_semantics<parallel>], iteration_bounds = array<i64: 2>, scalar_prefetch = 0 : i64, scratch_operands = 0 : i64, tpu.core_type = #tpu.core_type<tc>, window_params = [{transform_indices = @transform_0, window_bounds = array<i64: 1, 8, 256>}, {pipeline_mode = #tpu.pipeline_mode<synchronous>, transform_indices = @transform_1, window_bounds = array<i64: 16, 8>}, {pipeline_mode = #tpu.pipeline_mode<synchronous>, transform_indices = @transform_2, window_bounds = array<i64: 16, 1>}, {transform_indices = @transform_3, window_bounds = array<i64: 1, 16, 256>}]} {
    %c0 = arith.constant 0 : index
    %c0_0 = arith.constant 0 : index
    %c0_1 = arith.constant 0 : index
    %0 = vector.load %arg1[%c0, %c0_0, %c0_1] : memref<1x8x256xf32, #tpu.memory_space<vmem>>, vector<1x8x256xf32>
    %1 = vector.shape_cast %0 : vector<1x8x256xf32> to vector<8x256xf32>
    %2 = arith.truncf %1 : vector<8x256xf32> to vector<8x256xbf16>
    %c0_2 = arith.constant 0 : index
    %c0_3 = arith.constant 0 : index
    %3 = vector.load %arg2[%c0_2, %c0_3] : memref<16x8xbf16, #tpu.memory_space<vmem>>, vector<16x8xbf16>
    %cst = arith.constant dense<0.000000e+00> : vector<16x256xf32>
    %4 = tpu.matmul %3, %2, %cst {dimension_numbers = #tpu.dot_dimension_numbers<[1], [0], [0], [1], [0, 0, 1, 1], [], []>} : vector<16x8xbf16>, vector<8x256xbf16>, vector<16x256xf32> -> vector<16x256xf32>
    %c0_4 = arith.constant 0 : index
    %c0_5 = arith.constant 0 : index
    %5 = vector.load %arg3[%c0_4, %c0_5] : memref<16x1xf32, #tpu.memory_space<vmem>>, vector<16x1xf32>
    %6 = vector.broadcast %5 : vector<16x1xf32> to vector<16x256xf32>
    %7 = arith.addf %4, %6 : vector<16x256xf32>
    %cst_6 = arith.constant 0.000000e+00 : f32
    %8 = vector.broadcast %cst_6 : f32 to vector<16x256xf32>
    %9 = arith.maximumf %7, %8 : vector<16x256xf32>
    %10 = arith.truncf %9 : vector<16x256xf32> to vector<16x256xbf16>
    %c0_7 = arith.constant 0 : index
    %c0_8 = arith.constant 0 : index
    %c0_9 = arith.constant 0 : index
    %11 = vector.load %arg4[%c0_7, %c0_8, %c0_9] : memref<1x16x256xbf16, #tpu.memory_space<vmem>>, vector<1x16x256xbf16>
    %12 = vector.shape_cast %11 : vector<1x16x256xbf16> to vector<16x256xbf16>
    %13 = vector.shape_cast %10 : vector<16x256xbf16> to vector<1x16x256xbf16>
    tpu.vector_store %arg4[%c0_7, %c0_8, %c0_9], %13 {strides = array<i32>} : memref<1x16x256xbf16, #tpu.memory_space<vmem>>, vector<1x16x256xbf16>,
    return
  }
  func.func @transform_0(%arg0: i32) -> (i32, i32, i32) {
    %c0_i32 = arith.constant 0 : i32
    %c0_i32_0 = arith.constant 0 : i32
    %c0_i32_1 = arith.constant 0 : i32
    return %arg0, %c0_i32, %c0_i32_0 : i32, i32, i32
  }
  func.func @transform_1(%arg0: i32) -> (i32, i32) {
    %c0_i32 = arith.constant 0 : i32
    %c0_i32_0 = arith.constant 0 : i32
    %c0_i32_1 = arith.constant 0 : i32
    return %c0_i32, %c0_i32_0 : i32, i32
  }
  func.func @transform_2(%arg0: i32) -> (i32, i32) {
    %c0_i32 = arith.constant 0 : i32
    %c0_i32_0 = arith.constant 0 : i32
    %c0_i32_1 = arith.constant 0 : i32
    return %c0_i32, %c0_i32_0 : i32, i32
  }
  func.func @transform_3(%arg0: i32) -> (i32, i32, i32) {
    %c0_i32 = arith.constant 0 : i32
    %c0_i32_0 = arith.constant 0 : i32
    %c0_i32_1 = arith.constant 0 : i32
    return %arg0, %c0_i32, %c0_i32_0 : i32, i32, i32
  }
}

module attributes {stable_mosaic.version = 11 : i64} {
  func.func @_planar_conv_kernel(%arg0: i32, %arg1: memref<1x8x342xbf16, #tpu.memory_space<vmem>>, %arg2: memref<16x72xbf16, #tpu.memory_space<vmem>>, %arg3: memref<16x1xf32, #tpu.memory_space<vmem>>, %arg4: memref<1x16x288xbf16, #tpu.memory_space<vmem>>) attributes {dimension_semantics = [#tpu.dimension_semantics<parallel>], iteration_bounds = array<i64: 2>, scalar_prefetch = 0 : i64, scratch_operands = 0 : i64, tpu.core_type = #tpu.core_type<tc>, window_params = [{transform_indices = @transform_0, window_bounds = array<i64: 1, 8, 342>}, {pipeline_mode = #tpu.pipeline_mode<synchronous>, transform_indices = @transform_1, window_bounds = array<i64: 16, 72>}, {pipeline_mode = #tpu.pipeline_mode<synchronous>, transform_indices = @transform_2, window_bounds = array<i64: 16, 1>}, {transform_indices = @transform_3, window_bounds = array<i64: 1, 16, 288>}]} {
    %c0 = arith.constant 0 : index
    %c0_0 = arith.constant 0 : index
    %c0_1 = arith.constant 0 : index
    %0 = vector.load %arg1[%c0, %c0_0, %c0_1] : memref<1x8x342xbf16, #tpu.memory_space<vmem>>, vector<1x8x342xbf16>
    %1 = vector.shape_cast %0 : vector<1x8x342xbf16> to vector<8x342xbf16>
    %2 = arith.extf %1 : vector<8x342xbf16> to vector<8x342xf32>
    %3 = vector.extract_strided_slice %2 {offsets = [0, 0], sizes = [8, 288], strides = [1, 1]} : vector<8x342xf32> to vector<8x288xf32>
    %4 = vector.extract_strided_slice %2 {offsets = [0, 1], sizes = [8, 288], strides = [1, 1]} : vector<8x342xf32> to vector<8x288xf32>
    %5 = vector.extract_strided_slice %2 {offsets = [0, 2], sizes = [8, 288], strides = [1, 1]} : vector<8x342xf32> to vector<8x288xf32>
    %6 = vector.extract_strided_slice %2 {offsets = [0, 18], sizes = [8, 288], strides = [1, 1]} : vector<8x342xf32> to vector<8x288xf32>
    %7 = vector.extract_strided_slice %2 {offsets = [0, 19], sizes = [8, 288], strides = [1, 1]} : vector<8x342xf32> to vector<8x288xf32>
    %8 = vector.extract_strided_slice %2 {offsets = [0, 20], sizes = [8, 288], strides = [1, 1]} : vector<8x342xf32> to vector<8x288xf32>
    %9 = vector.extract_strided_slice %2 {offsets = [0, 36], sizes = [8, 288], strides = [1, 1]} : vector<8x342xf32> to vector<8x288xf32>
    %10 = vector.extract_strided_slice %2 {offsets = [0, 37], sizes = [8, 288], strides = [1, 1]} : vector<8x342xf32> to vector<8x288xf32>
    %11 = vector.extract_strided_slice %2 {offsets = [0, 38], sizes = [8, 288], strides = [1, 1]} : vector<8x342xf32> to vector<8x288xf32>
    %12 = tpu.concatenate %3, %4, %5, %6, %7, %8, %9, %10, %11 in 0 : vector<8x288xf32>, vector<8x288xf32>, vector<8x288xf32>, vector<8x288xf32>, vector<8x288xf32>, vector<8x288xf32>, vector<8x288xf32>, vector<8x288xf32>, vector<8x288xf32> -> vector<72x288xf32>
    %13 = arith.truncf %12 : vector<72x288xf32> to vector<72x288xbf16>
    %c0_2 = arith.constant 0 : index
    %c0_3 = arith.constant 0 : index
    %14 = vector.load %arg2[%c0_2, %c0_3] : memref<16x72xbf16, #tpu.memory_space<vmem>>, vector<16x72xbf16>
    %cst = arith.constant dense<0.000000e+00> : vector<16x288xf32>
    %15 = tpu.matmul %14, %13, %cst {dimension_numbers = #tpu.dot_dimension_numbers<[1], [0], [0], [1], [0, 0, 1, 1], [], []>} : vector<16x72xbf16>, vector<72x288xbf16>, vector<16x288xf32> -> vector<16x288xf32>
    %c0_4 = arith.constant 0 : index
    %c0_5 = arith.constant 0 : index
    %16 = vector.load %arg3[%c0_4, %c0_5] : memref<16x1xf32, #tpu.memory_space<vmem>>, vector<16x1xf32>
    %17 = vector.broadcast %16 : vector<16x1xf32> to vector<16x288xf32>
    %18 = arith.addf %15, %17 : vector<16x288xf32>
    %cst_6 = arith.constant 0.000000e+00 : f32
    %19 = vector.broadcast %cst_6 : f32 to vector<16x288xf32>
    %20 = arith.maximumf %18, %19 : vector<16x288xf32>
    %21 = arith.truncf %20 : vector<16x288xf32> to vector<16x288xbf16>
    %c0_7 = arith.constant 0 : index
    %c0_8 = arith.constant 0 : index
    %c0_9 = arith.constant 0 : index
    %22 = vector.load %arg4[%c0_7, %c0_8, %c0_9] : memref<1x16x288xbf16, #tpu.memory_space<vmem>>, vector<1x16x288xbf16>
    %23 = vector.shape_cast %22 : vector<1x16x288xbf16> to vector<16x288xbf16>
    %24 = vector.shape_cast %21 : vector<16x288xbf16> to vector<1x16x288xbf16>
    tpu.vector_store %arg4[%c0_7, %c0_8, %c0_9], %24 {strides = array<i32>} : memref<1x16x288xbf16, #tpu.memory_space<vmem>>, vector<1x16x288xbf16>,
    return
  }
  func.func @transform_0(%arg0: i32) -> (i32, i32, i32) {
    %c0_i32 = arith.constant 0 : i32
    %c0_i32_0 = arith.constant 0 : i32
    %c0_i32_1 = arith.constant 0 : i32
    return %arg0, %c0_i32, %c0_i32_0 : i32, i32, i32
  }
  func.func @transform_1(%arg0: i32) -> (i32, i32) {
    %c0_i32 = arith.constant 0 : i32
    %c0_i32_0 = arith.constant 0 : i32
    %c0_i32_1 = arith.constant 0 : i32
    return %c0_i32, %c0_i32_0 : i32, i32
  }
  func.func @transform_2(%arg0: i32) -> (i32, i32) {
    %c0_i32 = arith.constant 0 : i32
    %c0_i32_0 = arith.constant 0 : i32
    %c0_i32_1 = arith.constant 0 : i32
    return %c0_i32, %c0_i32_0 : i32, i32
  }
  func.func @transform_3(%arg0: i32) -> (i32, i32, i32) {
    %c0_i32 = arith.constant 0 : i32
    %c0_i32_0 = arith.constant 0 : i32
    %c0_i32_1 = arith.constant 0 : i32
    return %arg0, %c0_i32, %c0_i32_0 : i32, i32, i32
  }
}

module attributes {stable_mosaic.version = 11 : i64} {
  func.func @_planar_conv_kernel(%arg0: i32, %arg1: memref<1x16x324xbf16, #tpu.memory_space<vmem>>, %arg2: memref<16x144xbf16, #tpu.memory_space<vmem>>, %arg3: memref<16x1xf32, #tpu.memory_space<vmem>>, %arg4: memref<1x16x72xf32, #tpu.memory_space<vmem>>) attributes {dimension_semantics = [#tpu.dimension_semantics<parallel>], iteration_bounds = array<i64: 2>, scalar_prefetch = 0 : i64, scratch_operands = 0 : i64, tpu.core_type = #tpu.core_type<tc>, window_params = [{transform_indices = @transform_0, window_bounds = array<i64: 1, 16, 324>}, {pipeline_mode = #tpu.pipeline_mode<synchronous>, transform_indices = @transform_1, window_bounds = array<i64: 16, 144>}, {pipeline_mode = #tpu.pipeline_mode<synchronous>, transform_indices = @transform_2, window_bounds = array<i64: 16, 1>}, {transform_indices = @transform_3, window_bounds = array<i64: 1, 16, 72>}]} {
    %c0 = arith.constant 0 : index
    %c0_0 = arith.constant 0 : index
    %c0_1 = arith.constant 0 : index
    %0 = vector.load %arg1[%c0, %c0_0, %c0_1] : memref<1x16x324xbf16, #tpu.memory_space<vmem>>, vector<1x16x324xbf16>
    %1 = vector.shape_cast %0 : vector<1x16x324xbf16> to vector<16x324xbf16>
    %2 = arith.extf %1 : vector<16x324xbf16> to vector<16x324xf32>
    %3 = vector.extract_strided_slice %2 {offsets = [0, 0], sizes = [16, 72], strides = [1, 1]} : vector<16x324xf32> to vector<16x72xf32>
    %4 = vector.extract_strided_slice %2 {offsets = [0, 81], sizes = [16, 72], strides = [1, 1]} : vector<16x324xf32> to vector<16x72xf32>
    %5 = vector.extract_strided_slice %2 {offsets = [0, 1], sizes = [16, 72], strides = [1, 1]} : vector<16x324xf32> to vector<16x72xf32>
    %6 = vector.extract_strided_slice %2 {offsets = [0, 162], sizes = [16, 72], strides = [1, 1]} : vector<16x324xf32> to vector<16x72xf32>
    %7 = vector.extract_strided_slice %2 {offsets = [0, 243], sizes = [16, 72], strides = [1, 1]} : vector<16x324xf32> to vector<16x72xf32>
    %8 = vector.extract_strided_slice %2 {offsets = [0, 163], sizes = [16, 72], strides = [1, 1]} : vector<16x324xf32> to vector<16x72xf32>
    %9 = vector.extract_strided_slice %2 {offsets = [0, 9], sizes = [16, 72], strides = [1, 1]} : vector<16x324xf32> to vector<16x72xf32>
    %10 = vector.extract_strided_slice %2 {offsets = [0, 90], sizes = [16, 72], strides = [1, 1]} : vector<16x324xf32> to vector<16x72xf32>
    %11 = vector.extract_strided_slice %2 {offsets = [0, 10], sizes = [16, 72], strides = [1, 1]} : vector<16x324xf32> to vector<16x72xf32>
    %12 = tpu.concatenate %3, %4, %5, %6, %7, %8, %9, %10, %11 in 0 : vector<16x72xf32>, vector<16x72xf32>, vector<16x72xf32>, vector<16x72xf32>, vector<16x72xf32>, vector<16x72xf32>, vector<16x72xf32>, vector<16x72xf32>, vector<16x72xf32> -> vector<144x72xf32>
    %13 = arith.truncf %12 : vector<144x72xf32> to vector<144x72xbf16>
    %c0_2 = arith.constant 0 : index
    %c0_3 = arith.constant 0 : index
    %14 = vector.load %arg2[%c0_2, %c0_3] : memref<16x144xbf16, #tpu.memory_space<vmem>>, vector<16x144xbf16>
    %cst = arith.constant dense<0.000000e+00> : vector<16x72xf32>
    %15 = tpu.matmul %14, %13, %cst {dimension_numbers = #tpu.dot_dimension_numbers<[1], [0], [0], [1], [0, 0, 1, 1], [], []>} : vector<16x144xbf16>, vector<144x72xbf16>, vector<16x72xf32> -> vector<16x72xf32>
    %c0_4 = arith.constant 0 : index
    %c0_5 = arith.constant 0 : index
    %16 = vector.load %arg3[%c0_4, %c0_5] : memref<16x1xf32, #tpu.memory_space<vmem>>, vector<16x1xf32>
    %17 = vector.broadcast %16 : vector<16x1xf32> to vector<16x72xf32>
    %18 = arith.addf %15, %17 : vector<16x72xf32>
    %cst_6 = arith.constant 0.000000e+00 : f32
    %19 = vector.broadcast %cst_6 : f32 to vector<16x72xf32>
    %20 = arith.maximumf %18, %19 : vector<16x72xf32>
    %c0_7 = arith.constant 0 : index
    %c0_8 = arith.constant 0 : index
    %c0_9 = arith.constant 0 : index
    %21 = vector.load %arg4[%c0_7, %c0_8, %c0_9] : memref<1x16x72xf32, #tpu.memory_space<vmem>>, vector<1x16x72xf32>
    %22 = vector.shape_cast %21 : vector<1x16x72xf32> to vector<16x72xf32>
    %23 = vector.shape_cast %20 : vector<16x72xf32> to vector<1x16x72xf32>
    tpu.vector_store %arg4[%c0_7, %c0_8, %c0_9], %23 {strides = array<i32>} : memref<1x16x72xf32, #tpu.memory_space<vmem>>, vector<1x16x72xf32>,
    return
  }
  func.func @transform_0(%arg0: i32) -> (i32, i32, i32) {
    %c0_i32 = arith.constant 0 : i32
    %c0_i32_0 = arith.constant 0 : i32
    %c0_i32_1 = arith.constant 0 : i32
    return %arg0, %c0_i32, %c0_i32_0 : i32, i32, i32
  }
  func.func @transform_1(%arg0: i32) -> (i32, i32) {
    %c0_i32 = arith.constant 0 : i32
    %c0_i32_0 = arith.constant 0 : i32
    %c0_i32_1 = arith.constant 0 : i32
    return %c0_i32, %c0_i32_0 : i32, i32
  }
  func.func @transform_2(%arg0: i32) -> (i32, i32) {
    %c0_i32 = arith.constant 0 : i32
    %c0_i32_0 = arith.constant 0 : i32
    %c0_i32_1 = arith.constant 0 : i32
    return %c0_i32, %c0_i32_0 : i32, i32
  }
  func.func @transform_3(%arg0: i32) -> (i32, i32, i32) {
    %c0_i32 = arith.constant 0 : i32
    %c0_i32_0 = arith.constant 0 : i32
    %c0_i32_1 = arith.constant 0 : i32
    return %arg0, %c0_i32, %c0_i32_0 : i32, i32, i32
  }
}

module attributes {stable_mosaic.version = 11 : i64} {
  func.func @_planar_conv_kernel(%arg0: i32, %arg1: memref<1x8x324xbf16, #tpu.memory_space<vmem>>, %arg2: memref<16x72xbf16, #tpu.memory_space<vmem>>, %arg3: memref<16x1xf32, #tpu.memory_space<vmem>>, %arg4: memref<1x16x72xf32, #tpu.memory_space<vmem>>) attributes {dimension_semantics = [#tpu.dimension_semantics<parallel>], iteration_bounds = array<i64: 2>, scalar_prefetch = 0 : i64, scratch_operands = 0 : i64, tpu.core_type = #tpu.core_type<tc>, window_params = [{transform_indices = @transform_0, window_bounds = array<i64: 1, 8, 324>}, {pipeline_mode = #tpu.pipeline_mode<synchronous>, transform_indices = @transform_1, window_bounds = array<i64: 16, 72>}, {pipeline_mode = #tpu.pipeline_mode<synchronous>, transform_indices = @transform_2, window_bounds = array<i64: 16, 1>}, {transform_indices = @transform_3, window_bounds = array<i64: 1, 16, 72>}]} {
    %c0 = arith.constant 0 : index
    %c0_0 = arith.constant 0 : index
    %c0_1 = arith.constant 0 : index
    %0 = vector.load %arg1[%c0, %c0_0, %c0_1] : memref<1x8x324xbf16, #tpu.memory_space<vmem>>, vector<1x8x324xbf16>
    %1 = vector.shape_cast %0 : vector<1x8x324xbf16> to vector<8x324xbf16>
    %2 = arith.extf %1 : vector<8x324xbf16> to vector<8x324xf32>
    %3 = vector.extract_strided_slice %2 {offsets = [0, 0], sizes = [8, 72], strides = [1, 1]} : vector<8x324xf32> to vector<8x72xf32>
    %4 = vector.extract_strided_slice %2 {offsets = [0, 81], sizes = [8, 72], strides = [1, 1]} : vector<8x324xf32> to vector<8x72xf32>
    %5 = vector.extract_strided_slice %2 {offsets = [0, 1], sizes = [8, 72], strides = [1, 1]} : vector<8x324xf32> to vector<8x72xf32>
    %6 = vector.extract_strided_slice %2 {offsets = [0, 162], sizes = [8, 72], strides = [1, 1]} : vector<8x324xf32> to vector<8x72xf32>
    %7 = vector.extract_strided_slice %2 {offsets = [0, 243], sizes = [8, 72], strides = [1, 1]} : vector<8x324xf32> to vector<8x72xf32>
    %8 = vector.extract_strided_slice %2 {offsets = [0, 163], sizes = [8, 72], strides = [1, 1]} : vector<8x324xf32> to vector<8x72xf32>
    %9 = vector.extract_strided_slice %2 {offsets = [0, 9], sizes = [8, 72], strides = [1, 1]} : vector<8x324xf32> to vector<8x72xf32>
    %10 = vector.extract_strided_slice %2 {offsets = [0, 90], sizes = [8, 72], strides = [1, 1]} : vector<8x324xf32> to vector<8x72xf32>
    %11 = vector.extract_strided_slice %2 {offsets = [0, 10], sizes = [8, 72], strides = [1, 1]} : vector<8x324xf32> to vector<8x72xf32>
    %12 = tpu.concatenate %3, %4, %5, %6, %7, %8, %9, %10, %11 in 0 : vector<8x72xf32>, vector<8x72xf32>, vector<8x72xf32>, vector<8x72xf32>, vector<8x72xf32>, vector<8x72xf32>, vector<8x72xf32>, vector<8x72xf32>, vector<8x72xf32> -> vector<72x72xf32>
    %13 = arith.truncf %12 : vector<72x72xf32> to vector<72x72xbf16>
    %c0_2 = arith.constant 0 : index
    %c0_3 = arith.constant 0 : index
    %14 = vector.load %arg2[%c0_2, %c0_3] : memref<16x72xbf16, #tpu.memory_space<vmem>>, vector<16x72xbf16>
    %cst = arith.constant dense<0.000000e+00> : vector<16x72xf32>
    %15 = tpu.matmul %14, %13, %cst {dimension_numbers = #tpu.dot_dimension_numbers<[1], [0], [0], [1], [0, 0, 1, 1], [], []>} : vector<16x72xbf16>, vector<72x72xbf16>, vector<16x72xf32> -> vector<16x72xf32>
    %c0_4 = arith.constant 0 : index
    %c0_5 = arith.constant 0 : index
    %16 = vector.load %arg3[%c0_4, %c0_5] : memref<16x1xf32, #tpu.memory_space<vmem>>, vector<16x1xf32>
    %17 = vector.broadcast %16 : vector<16x1xf32> to vector<16x72xf32>
    %18 = arith.addf %15, %17 : vector<16x72xf32>
    %cst_6 = arith.constant 0.000000e+00 : f32
    %19 = vector.broadcast %cst_6 : f32 to vector<16x72xf32>
    %20 = arith.maximumf %18, %19 : vector<16x72xf32>
    %c0_7 = arith.constant 0 : index
    %c0_8 = arith.constant 0 : index
    %c0_9 = arith.constant 0 : index
    %21 = vector.load %arg4[%c0_7, %c0_8, %c0_9] : memref<1x16x72xf32, #tpu.memory_space<vmem>>, vector<1x16x72xf32>
    %22 = vector.shape_cast %21 : vector<1x16x72xf32> to vector<16x72xf32>
    %23 = vector.shape_cast %20 : vector<16x72xf32> to vector<1x16x72xf32>
    tpu.vector_store %arg4[%c0_7, %c0_8, %c0_9], %23 {strides = array<i32>} : memref<1x16x72xf32, #tpu.memory_space<vmem>>, vector<1x16x72xf32>,
    return
  }
  func.func @transform_0(%arg0: i32) -> (i32, i32, i32) {
    %c0_i32 = arith.constant 0 : i32
    %c0_i32_0 = arith.constant 0 : i32
    %c0_i32_1 = arith.constant 0 : i32
    return %arg0, %c0_i32, %c0_i32_0 : i32, i32, i32
  }
  func.func @transform_1(%arg0: i32) -> (i32, i32) {
    %c0_i32 = arith.constant 0 : i32
    %c0_i32_0 = arith.constant 0 : i32
    %c0_i32_1 = arith.constant 0 : i32
    return %c0_i32, %c0_i32_0 : i32, i32
  }
  func.func @transform_2(%arg0: i32) -> (i32, i32) {
    %c0_i32 = arith.constant 0 : i32
    %c0_i32_0 = arith.constant 0 : i32
    %c0_i32_1 = arith.constant 0 : i32
    return %c0_i32, %c0_i32_0 : i32, i32
  }
  func.func @transform_3(%arg0: i32) -> (i32, i32, i32) {
    %c0_i32 = arith.constant 0 : i32
    %c0_i32_0 = arith.constant 0 : i32
    %c0_i32_1 = arith.constant 0 : i32
    return %arg0, %c0_i32, %c0_i32_0 : i32, i32, i32
  }
}

</mosaic_0001>

<llo_original>
// kernel: reduction_block_forward.9
$region0: #{reduction_block_forward.9}
  #allocation0 [shape = 'u32[]', space=smem, size = 0x4, offset = 0x4, fixed_abs, tag = 'smem constant byte address 0x4 - core index']
  #allocation1 [shape = 'u32[72,128]{1,0:T(1,128)}', space=vmem, size = 0x9000, scoped, tag = 'internal scratch']
  %s0 = inlined_call_operand.vmem [shape: f32[2,8,324], index: 0, kind: input, shape index: {}]
  %s1 = inlined_call_operand.vmem [shape: f32[2,8,72], index: 1, kind: output, shape index: {}]
  %s2 = sld [smem:[#allocation0]]
  $region37: #{reduction_block_forward.9} parent=0
    _
  %s4 = ssub.s32 1, %s2
  %s5 = scalar_select 0, %s4, %s2
  loop: start=0, step=1, limit=4
  $region2: #{reduction_block_forward.9} parent=0 // loop_pre_header
    _
  $region3: #{reduction_block_forward.9} parent=0 // loop_header
    %s7 = sphi 0, %s11
    %p8 = scmp.ge.s32.totalorder %s7, 4
    %s17 = sphi 0, %s19
    %s20 = sphi 0, %s17
    %s21 = sphi 0, %s20
    %s37 = sphi 0, %s21
    %s43 = sphi 0, %s45
    %s46 = sphi 0, %s43
    %s47 = sphi 0, %s46
    %s63 = sphi 0, %s47
  $region4: #{reduction_block_forward.9} parent=0 // loop_header_branch
    %10 = sbr.rel (%p8) target = $region8
  $region5: #{reduction_block_forward.9} parent=0 // loop_body
    %s12 = ssub.s32 %s7, 1
    %s13 = ssub.s32 %s7, 2
    %s14 = sadd.s32 %s7, 1
    %s15 = ssub.s32 %s7, %s14
    %p16 = scmp.eq.s32.totalorder %s15, 0
    %s18 = sadd.s32 %s17, 1
    %s19 = scalar_select %p16, %s17, %s18
    %p22 = pneg %p16
    %p23 = scmp.eq.s32.totalorder %s7, 1
    %p24 = por %p22, %p23
    %p25 = scmp.ne.s32.totalorder %s17, %s20
    %p26 = scmp.eq.s32.totalorder %s7, 0
    %p27 = por %p25, %p26
    %p28 = scmp.ne.s32.totalorder %s17, %s20
    %p29 = scmp.eq.s32.totalorder %s12, 1
    %p30 = por %p28, %p29
    %p31 = scmp.ne.s32.totalorder %s20, %s21
    %p32 = scmp.eq.s32.totalorder %s12, 0
    %p33 = por %p31, %p32
    %p34 = scmp.ne.s32.totalorder %s20, %s21
    %p35 = scmp.eq.s32.totalorder %s13, 1
    %p36 = por %p34, %p35
    %p38 = scmp.ne.s32.totalorder %s21, %s37
    %p39 = scmp.eq.s32.totalorder %s13, 0
    %p40 = por %p38, %p39
    %s41 = ssub.s32 %s7, %s14
    %p42 = scmp.eq.s32.totalorder %s41, 0
    %s44 = sadd.s32 %s43, 1
    %s45 = scalar_select %p42, %s43, %s44
    %p48 = pneg %p42
    %p49 = scmp.eq.s32.totalorder %s7, 1
    %p50 = por %p48, %p49
    %p51 = scmp.ne.s32.totalorder %s43, %s46
    %p52 = scmp.eq.s32.totalorder %s7, 0
    %p53 = por %p51, %p52
    %p54 = scmp.ne.s32.totalorder %s43, %s46
    %p55 = scmp.eq.s32.totalorder %s12, 1
    %p56 = por %p54, %p55
    %p57 = scmp.ne.s32.totalorder %s46, %s47
    %p58 = scmp.eq.s32.totalorder %s12, 0
    %p59 = por %p57, %p58
    %p60 = scmp.ne.s32.totalorder %s46, %s47
    %p61 = scmp.eq.s32.totalorder %s13, 1
    %p62 = por %p60, %p61
    %p64 = scmp.ne.s32.totalorder %s47, %s63
    %p65 = scmp.eq.s32.totalorder %s13, 0
    %p66 = por %p64, %p65
    %p67 = scmp.le.s32.totalorder 1, %s7
    %p68 = scmp.lt.s32.totalorder %s7, 3
    %p69 = pnand %p67, %p68
    %p70 = pneg %p69
    // Predicated region
    $region9: #{reduction_block_forward.9} parent=5 // pred_check
      _
    $region10: #{reduction_block_forward.9} parent=5 // pred_check_branch
      %72 = sbr.rel (%p69) target = $region12
    $region11: #{reduction_block_forward.9} parent=5 // pred_region
      %s73 = ssub.s32 %s7, 1
    $region12: #{reduction_block_forward.9} parent=5 // pred_fallthru
      _
    %p74 = scmp.lt.s32.totalorder %s7, 2
    // Predicated region
    $region13: #{reduction_block_forward.9} parent=5 // pred_check
      %p75 = pneg %p74
    $region14: #{reduction_block_forward.9} parent=5 // pred_check_branch
      %77 = sbr.rel (%p75) target = $region16
    $region15: #{reduction_block_forward.9} parent=5 // pred_region
      // Predicated region
      $region17: #{reduction_block_forward.9} parent=15 // pred_check
        %p78 = pneg %p27
      $region18: #{reduction_block_forward.9} parent=15 // pred_check_branch
        %80 = sbr.rel (%p78) target = $region20
      $region19: #{reduction_block_forward.9} parent=15 // pred_region
        %p81 = scmp.lt.s32.totalorder %s7, 1
        %s82 = scalar_select %p81, %s7, 1
        %s83 = smul.addr %s82, 3
        %s84 = smul.addr %s83, 8
        %s85 = scalar_lea.vmem %s0, %s84
      $region20: #{reduction_block_forward.9} parent=15 // pred_fallthru
        _
    $region16: #{reduction_block_forward.9} parent=5 // pred_fallthru
      _
    %p86 = scmp.le.s32.totalorder 1, %s7
    %p87 = scmp.lt.s32.totalorder %s7, 3
    %p88 = pnand %p86, %p87
    %p89 = pneg %p88
    // Predicated region
    $region21: #{reduction_block_forward.9} parent=5 // pred_check
      _
    $region22: #{reduction_block_forward.9} parent=5 // pred_check_branch
      %91 = sbr.rel (%p88) target = $region24
    $region23: #{reduction_block_forward.9} parent=5 // pred_region
      %s92 = ssub.s32 %s7, 1
      %p93 = scmp.lt.s32.totalorder %s12, 1
      %s94 = scalar_select %p93, %s12, 1
      %s95 = smul.addr %s94, 3
      %s96 = smul.addr %s95, 8
      %s97 = scalar_lea.vmem %s0, %s96
      %p98 = pneg %p33
      %p99 = pneg %p30
      %p100 = pneg %p59
      %p101 = pneg %p56
      %p102 = scmp.lt.s32.totalorder %s12, 1
      %s103 = scalar_select %p102, %s12, 1
      %s104 = smul.addr %s103, 8
      %s105 = scalar_lea.vmem %s1, %s104
      %p106 = scmp.lt.s32.totalorder %s12, 1
      %s107 = scalar_select %p106, %s12, 1
      %s108 = smul.addr %s107, 3
      %s109 = smul.addr %s108, 8
      %s110 = scalar_lea.vmem %s0, %s109
      %p111 = scmp.lt.s32.totalorder %s12, 1
      %s112 = scalar_select %p111, %s12, 1
      %s113 = smul.addr %s112, 8
      %s114 = scalar_lea.vmem %s1, %s113
      %v115 = vld [vmem:[%s110] sm:$0xff]
      %v116 = vld [vmem:[%s110 + $0x8] sm:$0xff]
      %v117 = vld [vmem:[%s110 + $0x10] sm:$0xff]
      %120 = vrot.lane.b32.xlu0 %v115, 47
      %v121 = vpop.permute.xlu0 %120
      %122 = vrot.lane.b32.xlu0 %v116, 47
      %v123 = vpop.permute.xlu0 %122
      %vm124 = vcmask 384000
      %v125 = vsel %vm124, %v121, %v123
      %v127 = vmax.f32 %v115, %v125
      %128 = vrot.lane.b32.xlu0 %v115, 127
      %v129 = vpop.permute.xlu0 %128
      %v131 = vmax.f32 %v127, %v129
      %132 = vrot.lane.b32.xlu0 %v116, 94
      %v133 = vpop.permute.xlu0 %132
      %v135 = vmax.f32 %v131, %v133
      %137 = vrot.lane.b32.xlu0 %v116, 13
      %v138 = vpop.permute.xlu0 %137
      %139 = vrot.lane.b32.xlu0 %v117, 13
      %v140 = vpop.permute.xlu0 %139
      %vm141 = vcmask 105472
      %v142 = vsel %vm141, %v138, %v140
      %v144 = vmax.f32 %v135, %v142
      %145 = vrot.lane.b32.xlu0 %v116, 93
      %v146 = vpop.permute.xlu0 %145
      %v148 = vmax.f32 %v144, %v146
      %149 = vrot.lane.b32.xlu0 %v115, 119
      %v150 = vpop.permute.xlu0 %149
      %v152 = vmax.f32 %v148, %v150
      %153 = vrot.lane.b32.xlu0 %v115, 38
      %v154 = vpop.permute.xlu0 %153
      %155 = vrot.lane.b32.xlu0 %v116, 38
      %v156 = vpop.permute.xlu0 %155
      %vm157 = vcmask 310272
      %v158 = vsel %vm157, %v154, %v156
      %v160 = vmax.f32 %v152, %v158
      %161 = vrot.lane.b32.xlu0 %v115, 118
      %v162 = vpop.permute.xlu0 %161
      %v164 = vmax.f32 %v160, %v162
      %vm165 = vcmask 588800
      %166 = vst.msk [vmem:[%s114] sm:$0xff] %vm165, %v164
      %p167 = scmp.lt.s32.totalorder %s12, 1
      %s168 = scalar_select %p167, %s12, 1
      %s169 = smul.addr %s168, 8
      %s170 = scalar_lea.vmem %s1, %s169
      // Predicated region
      $region25: #{reduction_block_forward.9} parent=23 // pred_check
        %p171 = pneg %p56
      $region26: #{reduction_block_forward.9} parent=23 // pred_check_branch
        %173 = sbr.rel (%p171) target = $region28
      $region27: #{reduction_block_forward.9} parent=23 // pred_region
        _
      $region28: #{reduction_block_forward.9} parent=23 // pred_fallthru
        _
    $region24: #{reduction_block_forward.9} parent=5 // pred_fallthru
      _
    %p174 = scmp.le.s32.totalorder 2, %s7
    // Predicated region
    $region29: #{reduction_block_forward.9} parent=5 // pred_check
      %p175 = pneg %p174
    $region30: #{reduction_block_forward.9} parent=5 // pred_check_branch
      %177 = sbr.rel (%p175) target = $region32
    $region31: #{reduction_block_forward.9} parent=5 // pred_region
      %s178 = ssub.s32 %s7, 2
      // Predicated region
      $region33: #{reduction_block_forward.9} parent=31 // pred_check
        %p179 = pneg %p62
      $region34: #{reduction_block_forward.9} parent=31 // pred_check_branch
        %181 = sbr.rel (%p179) target = $region36
      $region35: #{reduction_block_forward.9} parent=31 // pred_region
        %p182 = scmp.lt.s32.totalorder %s13, 1
        %s183 = scalar_select %p182, %s13, 1
        %s184 = smul.addr %s183, 8
        %s185 = scalar_lea.vmem %s1, %s184
      $region36: #{reduction_block_forward.9} parent=31 // pred_fallthru
        _
    $region32: #{reduction_block_forward.9} parent=5 // pred_fallthru
      _
  $region6: #{reduction_block_forward.9} parent=0 // loop_footer
    %s11 = sadd.s32 1, %s7
  $region7: #{reduction_block_forward.9} parent=0 // loop_footer_branch
    %6 = sbr.rel target = $region3
  $region8: #{reduction_block_forward.9} parent=0 // loop_exit
    _

// kernel: reduction_block_forward.5
$region0: #{reduction_block_forward.5}
  #allocation0 [shape = 'u32[]', space=smem, size = 0x4, offset = 0x4, fixed_abs, tag = 'smem constant byte address 0x4 - core index']
  #allocation1 [shape = 'u32[72,128]{1,0:T(1,128)}', space=vmem, size = 0x9000, scoped, tag = 'internal scratch']
  %s0 = inlined_call_operand.vmem [shape: f32[2,8,256], index: 0, kind: input, shape index: {}]
  %s1 = inlined_call_operand.vmem [shape: bf16[16,8], index: 1, kind: input, shape index: {}]
  %s2 = inlined_call_operand.vmem [shape: f32[16,1], index: 2, kind: input, shape index: {}]
  %s3 = inlined_call_operand.vmem [shape: bf16[2,16,256], index: 3, kind: output, shape index: {}]
  %s4 = sld [smem:[#allocation0]]
  $region45: #{reduction_block_forward.5} parent=0
    _
  %s6 = ssub.s32 1, %s4
  %s7 = scalar_select 0, %s6, %s4
  loop: start=0, step=1, limit=4
  $region2: #{reduction_block_forward.5} parent=0 // loop_pre_header
    _
  $region3: #{reduction_block_forward.5} parent=0 // loop_header
    %s9 = sphi 0, %s13
    %p10 = scmp.ge.s32.totalorder %s9, 4
    %s19 = sphi 0, %s21
    %s22 = sphi 0, %s19
    %s23 = sphi 0, %s22
    %s39 = sphi 0, %s23
    %s43 = sphi 0, %s43
    %s45 = sphi 0, %s43
    %s46 = sphi 0, %s45
    %s60 = sphi 0, %s46
    %s64 = sphi 0, %s64
    %s66 = sphi 0, %s64
    %s67 = sphi 0, %s66
    %s81 = sphi 0, %s67
    %s87 = sphi 0, %s89
    %s90 = sphi 0, %s87
    %s91 = sphi 0, %s90
    %s107 = sphi 0, %s91
  $region4: #{reduction_block_forward.5} parent=0 // loop_header_branch
    %12 = sbr.rel (%p10) target = $region8
  $region5: #{reduction_block_forward.5} parent=0 // loop_body
    %s14 = ssub.s32 %s9, 1
    %s15 = ssub.s32 %s9, 2
    %s16 = sadd.s32 %s9, 1
    %s17 = ssub.s32 %s9, %s16
    %p18 = scmp.eq.s32.totalorder %s17, 0
    %s20 = sadd.s32 %s19, 1
    %s21 = scalar_select %p18, %s19, %s20
    %p24 = pneg %p18
    %p25 = scmp.eq.s32.totalorder %s9, 1
    %p26 = por %p24, %p25
    %p27 = scmp.ne.s32.totalorder %s19, %s22
    %p28 = scmp.eq.s32.totalorder %s9, 0
    %p29 = por %p27, %p28
    %p30 = scmp.ne.s32.totalorder %s19, %s22
    %p31 = scmp.eq.s32.totalorder %s14, 1
    %p32 = por %p30, %p31
    %p33 = scmp.ne.s32.totalorder %s22, %s23
    %p34 = scmp.eq.s32.totalorder %s14, 0
    %p35 = por %p33, %p34
    %p36 = scmp.ne.s32.totalorder %s22, %s23
    %p37 = scmp.eq.s32.totalorder %s15, 1
    %p38 = por %p36, %p37
    %p40 = scmp.ne.s32.totalorder %s23, %s39
    %p41 = scmp.eq.s32.totalorder %s15, 0
    %p42 = por %p40, %p41
    %s44 = sadd.s32 %s43, 1
    %p47 = scmp.eq.s32.totalorder %s9, 1
    %p48 = scmp.ne.s32.totalorder %s43, %s45
    %p49 = scmp.eq.s32.totalorder %s9, 0
    %p50 = por %p48, %p49
    %p51 = scmp.ne.s32.totalorder %s43, %s45
    %p52 = scmp.eq.s32.totalorder %s14, 1
    %p53 = por %p51, %p52
    %p54 = scmp.ne.s32.totalorder %s45, %s46
    %p55 = scmp.eq.s32.totalorder %s14, 0
    %p56 = por %p54, %p55
    %p57 = scmp.ne.s32.totalorder %s45, %s46
    %p58 = scmp.eq.s32.totalorder %s15, 1
    %p59 = por %p57, %p58
    %p61 = scmp.ne.s32.totalorder %s46, %s60
    %p62 = scmp.eq.s32.totalorder %s15, 0
    %p63 = por %p61, %p62
    %s65 = sadd.s32 %s64, 1
    %p68 = scmp.eq.s32.totalorder %s9, 1
    %p69 = scmp.ne.s32.totalorder %s64, %s66
    %p70 = scmp.eq.s32.totalorder %s9, 0
    %p71 = por %p69, %p70
    %p72 = scmp.ne.s32.totalorder %s64, %s66
    %p73 = scmp.eq.s32.totalorder %s14, 1
    %p74 = por %p72, %p73
    %p75 = scmp.ne.s32.totalorder %s66, %s67
    %p76 = scmp.eq.s32.totalorder %s14, 0
    %p77 = por %p75, %p76
    %p78 = scmp.ne.s32.totalorder %s66, %s67
    %p79 = scmp.eq.s32.totalorder %s15, 1
    %p80 = por %p78, %p79
    %p82 = scmp.ne.s32.totalorder %s67, %s81
    %p83 = scmp.eq.s32.totalorder %s15, 0
    %p84 = por %p82, %p83
    %s85 = ssub.s32 %s9, %s16
    %p86 = scmp.eq.s32.totalorder %s85, 0
    %s88 = sadd.s32 %s87, 1
    %s89 = scalar_select %p86, %s87, %s88
    %p92 = pneg %p86
    %p93 = scmp.eq.s32.totalorder %s9, 1
    %p94 = por %p92, %p93
    %p95 = scmp.ne.s32.totalorder %s87, %s90
    %p96 = scmp.eq.s32.totalorder %s9, 0
    %p97 = por %p95, %p96
    %p98 = scmp.ne.s32.totalorder %s87, %s90
    %p99 = scmp.eq.s32.totalorder %s14, 1
    %p100 = por %p98, %p99
    %p101 = scmp.ne.s32.totalorder %s90, %s91
    %p102 = scmp.eq.s32.totalorder %s14, 0
    %p103 = por %p101, %p102
    %p104 = scmp.ne.s32.totalorder %s90, %s91
    %p105 = scmp.eq.s32.totalorder %s15, 1
    %p106 = por %p104, %p105
    %p108 = scmp.ne.s32.totalorder %s91, %s107
    %p109 = scmp.eq.s32.totalorder %s15, 0
    %p110 = por %p108, %p109
    %p111 = scmp.le.s32.totalorder 1, %s9
    %p112 = scmp.lt.s32.totalorder %s9, 3
    %p113 = pnand %p111, %p112
    %p114 = pneg %p113
    // Predicated region
    $region9: #{reduction_block_forward.5} parent=5 // pred_check
      _
    $region10: #{reduction_block_forward.5} parent=5 // pred_check_branch
      %116 = sbr.rel (%p113) target = $region12
    $region11: #{reduction_block_forward.5} parent=5 // pred_region
      %s117 = ssub.s32 %s9, 1
      // Predicated region
      $region13: #{reduction_block_forward.5} parent=11 // pred_check
        %p118 = pneg %p56
      $region14: #{reduction_block_forward.5} parent=11 // pred_check_branch
        %120 = sbr.rel (%p118) target = $region16
      $region15: #{reduction_block_forward.5} parent=11 // pred_region
        _
      $region16: #{reduction_block_forward.5} parent=11 // pred_fallthru
        _
      // Predicated region
      $region17: #{reduction_block_forward.5} parent=11 // pred_check
        %p121 = pneg %p77
      $region18: #{reduction_block_forward.5} parent=11 // pred_check_branch
        %123 = sbr.rel (%p121) target = $region20
      $region19: #{reduction_block_forward.5} parent=11 // pred_region
        _
      $region20: #{reduction_block_forward.5} parent=11 // pred_fallthru
        _
    $region12: #{reduction_block_forward.5} parent=5 // pred_fallthru
      _
    %p124 = scmp.lt.s32.totalorder %s9, 2
    // Predicated region
    $region21: #{reduction_block_forward.5} parent=5 // pred_check
      %p125 = pneg %p124
    $region22: #{reduction_block_forward.5} parent=5 // pred_check_branch
      %127 = sbr.rel (%p125) target = $region24
    $region23: #{reduction_block_forward.5} parent=5 // pred_region
      // Predicated region
      $region25: #{reduction_block_forward.5} parent=23 // pred_check
        %p128 = pneg %p29
      $region26: #{reduction_block_forward.5} parent=23 // pred_check_branch
        %130 = sbr.rel (%p128) target = $region28
      $region27: #{reduction_block_forward.5} parent=23 // pred_region
        %p131 = scmp.lt.s32.totalorder %s9, 1
        %s132 = scalar_select %p131, %s9, 1
        %s133 = smul.addr %s132, 2
        %s134 = smul.addr %s133, 8
        %s135 = scalar_lea.vmem %s0, %s134
      $region28: #{reduction_block_forward.5} parent=23 // pred_fallthru
        _
    $region24: #{reduction_block_forward.5} parent=5 // pred_fallthru
      _
    %p136 = scmp.le.s32.totalorder 1, %s9
    %p137 = scmp.lt.s32.totalorder %s9, 3
    %p138 = pnand %p136, %p137
    %p139 = pneg %p138
    // Predicated region
    $region29: #{reduction_block_forward.5} parent=5 // pred_check
      _
    $region30: #{reduction_block_forward.5} parent=5 // pred_check_branch
      %141 = sbr.rel (%p138) target = $region32
    $region31: #{reduction_block_forward.5} parent=5 // pred_region
      %s142 = ssub.s32 %s9, 1
      %p143 = scmp.lt.s32.totalorder %s14, 1
      %s144 = scalar_select %p143, %s14, 1
      %s145 = smul.addr %s144, 2
      %s146 = smul.addr %s145, 8
      %s147 = scalar_lea.vmem %s0, %s146
      %p148 = pneg %p35
      %p149 = pneg %p32
      %p150 = pneg %p56
      %p151 = pneg %p53
      %p152 = pneg %p77
      %p153 = pneg %p74
      %p154 = pneg %p103
      %p155 = pneg %p100
      %p156 = scmp.lt.s32.totalorder %s14, 1
      %s157 = scalar_select %p156, %s14, 1
      %s158 = smul.addr %s157, 4
      %s159 = smul.addr %s158, 4
      %s160 = scalar_lea.vmem %s3, %s159
      %p161 = scmp.lt.s32.totalorder %s14, 1
      %s162 = scalar_select %p161, %s14, 1
      %s163 = smul.addr %s162, 2
      %s164 = smul.addr %s163, 8
      %s165 = scalar_lea.vmem %s0, %s164
      %p166 = scmp.lt.s32.totalorder %s14, 1
      %s167 = scalar_select %p166, %s14, 1
      %s168 = smul.addr %s167, 4
      %s169 = smul.addr %s168, 4
      %s170 = scalar_lea.vmem %s3, %s169
      %v172 = vld [vmem:[%s165] sm:$0xff]
      %v173 = vld [vmem:[%s165 + $0x8] sm:$0xff]
      %v174 = vpack.c.bf16 %v172, %v172
      %v175 = vpack.c.bf16 %v173, %v173
      %v176 = vld [vmem:[%s1] sm:$0xf]
      %v177 = vld [vmem:[%s1 + $0x4] sm:$0xf]
      %v178 = vld [vmem:[%s2] sm:$0xff]
      %v179 = vld [vmem:[%s2 + $0x8] sm:$0xff]
      %181 = vset.pattern.permute.xlu0 0
      %182 = vperm.xlu0 %181, %v178
      %v183 = vpop.permute.xlu0 %182
      %186 = vset.pattern.permute.xlu0 0
      %187 = vperm.xlu0 %186, %v179
      %v188 = vpop.permute.xlu0 %187
      %v192 = vunpack.c.l.b16 %v176
      %v193 = vunpack.c.l.b16 %v177
      %v194 = vpack.c.b16 %v193, %v192
      %vm195 = vcmask 64512
      %v197 = vsel %vm195, %v194, 0
      %vm199 = vcmask 1043456
      %v201 = vsel %vm199, %v174, 0
      %v204 = vsel %vm199, %v175, 0
      %206 = vmatpush.bf16.msra.mxu0 0
      %207 = vmatpush.bf16.msra.mxu0 0
      %208 = vmatpush.bf16.msra.mxu0 0
      %209 = vmatpush.bf16.msra.mxu0 0
      %210 = vmatpush.bf16.msra.mxu0 0
      %211 = vmatpush.bf16.msra.mxu0 0
      %212 = vmatpush.bf16.msra.mxu0 0
      %213 = vmatpush.bf16.msra.mxu0 %v201
      %214 = vmatmul.bf16.gmra.mxu0 %v197
      %v215 = vpop.f32.mrf.mxu0
      %v216 = vadd.f32 %v183, %v215
      %v217 = vpop.f32.mrf.mxu0
      %v218 = vadd.f32 %v188, %v217
      %219 = vdwg.mxu0
      %220 = vmatpush.bf16.msra.mxu0 0
      %221 = vmatpush.bf16.msra.mxu0 0
      %222 = vmatpush.bf16.msra.mxu0 0
      %223 = vmatpush.bf16.msra.mxu0 0
      %224 = vmatpush.bf16.msra.mxu0 0
      %225 = vmatpush.bf16.msra.mxu0 0
      %226 = vmatpush.bf16.msra.mxu0 0
      %227 = vmatpush.bf16.msra.mxu0 %v204
      %228 = vmatmul.bf16.gmra.mxu0 %v197
      %v229 = vpop.f32.mrf.mxu0
      %v230 = vadd.f32 %v183, %v229
      %v231 = vpop.f32.mrf.mxu0
      %v232 = vadd.f32 %v188, %v231
      %233 = vdwg.mxu0
      %v234 = vmax.f32 %v216, 0.0
      %v235 = vmax.f32 %v230, 0.0
      %v236 = vmax.f32 %v218, 0.0
      %v237 = vmax.f32 %v232, 0.0
      %v238 = vpack.c.bf16 %v235, %v234
      %v239 = vpack.c.bf16 %v237, %v236
      %240 = vst [vmem:[%s170] sm:$0xff] %v238
      %241 = vst [vmem:[%s170 + $0x8] sm:$0xff] %v239
      %p242 = scmp.lt.s32.totalorder %s14, 1
      %s243 = scalar_select %p242, %s14, 1
      %s244 = smul.addr %s243, 4
      %s245 = smul.addr %s244, 4
      %s246 = scalar_lea.vmem %s3, %s245
      // Predicated region
      $region33: #{reduction_block_forward.5} parent=31 // pred_check
        %p247 = pneg %p100
      $region34: #{reduction_block_forward.5} parent=31 // pred_check_branch
        %249 = sbr.rel (%p247) target = $region36
      $region35: #{reduction_block_forward.5} parent=31 // pred_region
        _
      $region36: #{reduction_block_forward.5} parent=31 // pred_fallthru
        _
    $region32: #{reduction_block_forward.5} parent=5 // pred_fallthru
      _
    %p250 = scmp.le.s32.totalorder 2, %s9
    // Predicated region
    $region37: #{reduction_block_forward.5} parent=5 // pred_check
      %p251 = pneg %p250
    $region38: #{reduction_block_forward.5} parent=5 // pred_check_branch
      %253 = sbr.rel (%p251) target = $region40
    $region39: #{reduction_block_forward.5} parent=5 // pred_region
      %s254 = ssub.s32 %s9, 2
      // Predicated region
      $region41: #{reduction_block_forward.5} parent=39 // pred_check
        %p255 = pneg %p106
      $region42: #{reduction_block_forward.5} parent=39 // pred_check_branch
        %257 = sbr.rel (%p255) target = $region44
      $region43: #{reduction_block_forward.5} parent=39 // pred_region
        %p258 = scmp.lt.s32.totalorder %s15, 1
        %s259 = scalar_select %p258, %s15, 1
        %s260 = smul.addr %s259, 4
        %s261 = smul.addr %s260, 4
        %s262 = scalar_lea.vmem %s3, %s261
      $region44: #{reduction_block_forward.5} parent=39 // pred_fallthru
        _
    $region40: #{reduction_block_forward.5} parent=5 // pred_fallthru
      _
  $region6: #{reduction_block_forward.5} parent=0 // loop_footer
    %s13 = sadd.s32 1, %s9
  $region7: #{reduction_block_forward.5} parent=0 // loop_footer_branch
    %8 = sbr.rel target = $region3
  $region8: #{reduction_block_forward.5} parent=0 // loop_exit
    _

// kernel: reduction_block_forward.7
$region0: #{reduction_block_forward.7}
  #allocation0 [shape = 'u32[]', space=smem, size = 0x4, offset = 0x4, fixed_abs, tag = 'smem constant byte address 0x4 - core index']
  #allocation1 [shape = 'u32[72,128]{1,0:T(1,128)}', space=vmem, size = 0x9000, scoped, tag = 'internal scratch']
  %s0 = inlined_call_operand.vmem [shape: bf16[2,8,342], index: 0, kind: input, shape index: {}]
  %s1 = inlined_call_operand.vmem [shape: bf16[16,72], index: 1, kind: input, shape index: {}]
  %s2 = inlined_call_operand.vmem [shape: f32[16,1], index: 2, kind: input, shape index: {}]
  %s3 = inlined_call_operand.vmem [shape: bf16[2,16,288], index: 3, kind: output, shape index: {}]
  %s4 = sld [smem:[#allocation0]]
  $region45: #{reduction_block_forward.7} parent=0
    _
  %s6 = ssub.s32 1, %s4
  %s7 = scalar_select 0, %s6, %s4
  loop: start=0, step=1, limit=4
  $region2: #{reduction_block_forward.7} parent=0 // loop_pre_header
    _
  $region3: #{reduction_block_forward.7} parent=0 // loop_header
    %s9 = sphi 0, %s13
    %p10 = scmp.ge.s32.totalorder %s9, 4
    %s19 = sphi 0, %s21
    %s22 = sphi 0, %s19
    %s23 = sphi 0, %s22
    %s39 = sphi 0, %s23
    %s43 = sphi 0, %s43
    %s45 = sphi 0, %s43
    %s46 = sphi 0, %s45
    %s60 = sphi 0, %s46
    %s64 = sphi 0, %s64
    %s66 = sphi 0, %s64
    %s67 = sphi 0, %s66
    %s81 = sphi 0, %s67
    %s87 = sphi 0, %s89
    %s90 = sphi 0, %s87
    %s91 = sphi 0, %s90
    %s107 = sphi 0, %s91
  $region4: #{reduction_block_forward.7} parent=0 // loop_header_branch
    %12 = sbr.rel (%p10) target = $region8
  $region5: #{reduction_block_forward.7} parent=0 // loop_body
    %s14 = ssub.s32 %s9, 1
    %s15 = ssub.s32 %s9, 2
    %s16 = sadd.s32 %s9, 1
    %s17 = ssub.s32 %s9, %s16
    %p18 = scmp.eq.s32.totalorder %s17, 0
    %s20 = sadd.s32 %s19, 1
    %s21 = scalar_select %p18, %s19, %s20
    %p24 = pneg %p18
    %p25 = scmp.eq.s32.totalorder %s9, 1
    %p26 = por %p24, %p25
    %p27 = scmp.ne.s32.totalorder %s19, %s22
    %p28 = scmp.eq.s32.totalorder %s9, 0
    %p29 = por %p27, %p28
    %p30 = scmp.ne.s32.totalorder %s19, %s22
    %p31 = scmp.eq.s32.totalorder %s14, 1
    %p32 = por %p30, %p31
    %p33 = scmp.ne.s32.totalorder %s22, %s23
    %p34 = scmp.eq.s32.totalorder %s14, 0
    %p35 = por %p33, %p34
    %p36 = scmp.ne.s32.totalorder %s22, %s23
    %p37 = scmp.eq.s32.totalorder %s15, 1
    %p38 = por %p36, %p37
    %p40 = scmp.ne.s32.totalorder %s23, %s39
    %p41 = scmp.eq.s32.totalorder %s15, 0
    %p42 = por %p40, %p41
    %s44 = sadd.s32 %s43, 1
    %p47 = scmp.eq.s32.totalorder %s9, 1
    %p48 = scmp.ne.s32.totalorder %s43, %s45
    %p49 = scmp.eq.s32.totalorder %s9, 0
    %p50 = por %p48, %p49
    %p51 = scmp.ne.s32.totalorder %s43, %s45
    %p52 = scmp.eq.s32.totalorder %s14, 1
    %p53 = por %p51, %p52
    %p54 = scmp.ne.s32.totalorder %s45, %s46
    %p55 = scmp.eq.s32.totalorder %s14, 0
    %p56 = por %p54, %p55
    %p57 = scmp.ne.s32.totalorder %s45, %s46
    %p58 = scmp.eq.s32.totalorder %s15, 1
    %p59 = por %p57, %p58
    %p61 = scmp.ne.s32.totalorder %s46, %s60
    %p62 = scmp.eq.s32.totalorder %s15, 0
    %p63 = por %p61, %p62
    %s65 = sadd.s32 %s64, 1
    %p68 = scmp.eq.s32.totalorder %s9, 1
    %p69 = scmp.ne.s32.totalorder %s64, %s66
    %p70 = scmp.eq.s32.totalorder %s9, 0
    %p71 = por %p69, %p70
    %p72 = scmp.ne.s32.totalorder %s64, %s66
    %p73 = scmp.eq.s32.totalorder %s14, 1
    %p74 = por %p72, %p73
    %p75 = scmp.ne.s32.totalorder %s66, %s67
    %p76 = scmp.eq.s32.totalorder %s14, 0
    %p77 = por %p75, %p76
    %p78 = scmp.ne.s32.totalorder %s66, %s67
    %p79 = scmp.eq.s32.totalorder %s15, 1
    %p80 = por %p78, %p79
    %p82 = scmp.ne.s32.totalorder %s67, %s81
    %p83 = scmp.eq.s32.totalorder %s15, 0
    %p84 = por %p82, %p83
    %s85 = ssub.s32 %s9, %s16
    %p86 = scmp.eq.s32.totalorder %s85, 0
    %s88 = sadd.s32 %s87, 1
    %s89 = scalar_select %p86, %s87, %s88
    %p92 = pneg %p86
    %p93 = scmp.eq.s32.totalorder %s9, 1
    %p94 = por %p92, %p93
    %p95 = scmp.ne.s32.totalorder %s87, %s90
    %p96 = scmp.eq.s32.totalorder %s9, 0
    %p97 = por %p95, %p96
    %p98 = scmp.ne.s32.totalorder %s87, %s90
    %p99 = scmp.eq.s32.totalorder %s14, 1
    %p100 = por %p98, %p99
    %p101 = scmp.ne.s32.totalorder %s90, %s91
    %p102 = scmp.eq.s32.totalorder %s14, 0
    %p103 = por %p101, %p102
    %p104 = scmp.ne.s32.totalorder %s90, %s91
    %p105 = scmp.eq.s32.totalorder %s15, 1
    %p106 = por %p104, %p105
    %p108 = scmp.ne.s32.totalorder %s91, %s107
    %p109 = scmp.eq.s32.totalorder %s15, 0
    %p110 = por %p108, %p109
    %p111 = scmp.le.s32.totalorder 1, %s9
    %p112 = scmp.lt.s32.totalorder %s9, 3
    %p113 = pnand %p111, %p112
    %p114 = pneg %p113
    // Predicated region
    $region9: #{reduction_block_forward.7} parent=5 // pred_check
      _
    $region10: #{reduction_block_forward.7} parent=5 // pred_check_branch
      %116 = sbr.rel (%p113) target = $region12
    $region11: #{reduction_block_forward.7} parent=5 // pred_region
      %s117 = ssub.s32 %s9, 1
      // Predicated region
      $region13: #{reduction_block_forward.7} parent=11 // pred_check
        %p118 = pneg %p56
      $region14: #{reduction_block_forward.7} parent=11 // pred_check_branch
        %120 = sbr.rel (%p118) target = $region16
      $region15: #{reduction_block_forward.7} parent=11 // pred_region
        _
      $region16: #{reduction_block_forward.7} parent=11 // pred_fallthru
        _
      // Predicated region
      $region17: #{reduction_block_forward.7} parent=11 // pred_check
        %p121 = pneg %p77
      $region18: #{reduction_block_forward.7} parent=11 // pred_check_branch
        %123 = sbr.rel (%p121) target = $region20
      $region19: #{reduction_block_forward.7} parent=11 // pred_region
        _
      $region20: #{reduction_block_forward.7} parent=11 // pred_fallthru
        _
    $region12: #{reduction_block_forward.7} parent=5 // pred_fallthru
      _
    %p124 = scmp.lt.s32.totalorder %s9, 2
    // Predicated region
    $region21: #{reduction_block_forward.7} parent=5 // pred_check
      %p125 = pneg %p124
    $region22: #{reduction_block_forward.7} parent=5 // pred_check_branch
      %127 = sbr.rel (%p125) target = $region24
    $region23: #{reduction_block_forward.7} parent=5 // pred_region
      // Predicated region
      $region25: #{reduction_block_forward.7} parent=23 // pred_check
        %p128 = pneg %p29
      $region26: #{reduction_block_forward.7} parent=23 // pred_check_branch
        %130 = sbr.rel (%p128) target = $region28
      $region27: #{reduction_block_forward.7} parent=23 // pred_region
        %p131 = scmp.lt.s32.totalorder %s9, 1
        %s132 = scalar_select %p131, %s9, 1
        %s133 = smul.addr %s132, 3
        %s134 = smul.addr %s133, 4
        %s135 = scalar_lea.vmem %s0, %s134
      $region28: #{reduction_block_forward.7} parent=23 // pred_fallthru
        _
    $region24: #{reduction_block_forward.7} parent=5 // pred_fallthru
      _
    %p136 = scmp.le.s32.totalorder 1, %s9
    %p137 = scmp.lt.s32.totalorder %s9, 3
    %p138 = pnand %p136, %p137
    %p139 = pneg %p138
    // Predicated region
    $region29: #{reduction_block_forward.7} parent=5 // pred_check
      _
    $region30: #{reduction_block_forward.7} parent=5 // pred_check_branch
      %141 = sbr.rel (%p138) target = $region32
    $region31: #{reduction_block_forward.7} parent=5 // pred_region
      %s142 = ssub.s32 %s9, 1
      %p143 = scmp.lt.s32.totalorder %s14, 1
      %s144 = scalar_select %p143, %s14, 1
      %s145 = smul.addr %s144, 3
      %s146 = smul.addr %s145, 4
      %s147 = scalar_lea.vmem %s0, %s146
      %p148 = pneg %p35
      %p149 = pneg %p32
      %p150 = pneg %p56
      %p151 = pneg %p53
      %p152 = pneg %p77
      %p153 = pneg %p74
      %p154 = pneg %p103
      %p155 = pneg %p100
      %p156 = scmp.lt.s32.totalorder %s14, 1
      %s157 = scalar_select %p156, %s14, 1
      %s158 = smul.addr %s157, 6
      %s159 = smul.addr %s158, 4
      %s160 = scalar_lea.vmem %s3, %s159
      %p161 = scmp.lt.s32.totalorder %s14, 1
      %s162 = scalar_select %p161, %s14, 1
      %s163 = smul.addr %s162, 3
      %s164 = smul.addr %s163, 4
      %s165 = scalar_lea.vmem %s0, %s164
      %p166 = scmp.lt.s32.totalorder %s14, 1
      %s167 = scalar_select %p166, %s14, 1
      %s168 = smul.addr %s167, 6
      %s169 = smul.addr %s168, 4
      %s170 = scalar_lea.vmem %s3, %s169
      %v172 = vld [vmem:[%s165] sm:$0xff]
      %v173 = vld [vmem:[%s165 + $0x8] sm:$0xf]
      %v174 = vunpack.c.l.bf16 %v172
      %v175 = vunpack.c.h.bf16 %v172
      %v176 = vunpack.c.l.bf16 %v173
      %180 = vrot.lane.b32.xlu0 %v174, 127
      %v181 = vpop.permute.xlu0 %180
      %182 = vrot.lane.b32.xlu0 %v175, 127
      %v183 = vpop.permute.xlu0 %182
      %184 = vrot.lane.b32.xlu0 %v176, 127
      %v185 = vpop.permute.xlu0 %184
      %vm186 = vcmask 1039360
      %v187 = vsel %vm186, %v181, %v183
      %v188 = vsel %vm186, %v183, %v185
      %192 = vrot.lane.b32.xlu0 %v174, 126
      %v193 = vpop.permute.xlu0 %192
      %194 = vrot.lane.b32.xlu0 %v175, 126
      %v195 = vpop.permute.xlu0 %194
      %196 = vrot.lane.b32.xlu0 %v176, 126
      %v197 = vpop.permute.xlu0 %196
      %vm198 = vcmask 1031168
      %v199 = vsel %vm198, %v193, %v195
      %v200 = vsel %vm198, %v195, %v197
      %204 = vrot.lane.b32.xlu0 %v174, 110
      %v205 = vpop.permute.xlu0 %204
      %206 = vrot.lane.b32.xlu0 %v175, 110
      %v207 = vpop.permute.xlu0 %206
      %208 = vrot.lane.b32.xlu0 %v176, 110
      %v209 = vpop.permute.xlu0 %208
      %vm210 = vcmask 900096
      %v211 = vsel %vm210, %v205, %v207
      %v212 = vsel %vm210, %v207, %v209
      %216 = vrot.lane.b32.xlu0 %v174, 109
      %v217 = vpop.permute.xlu0 %216
      %218 = vrot.lane.b32.xlu0 %v175, 109
      %v219 = vpop.permute.xlu0 %218
      %220 = vrot.lane.b32.xlu0 %v176, 109
      %v221 = vpop.permute.xlu0 %220
      %vm222 = vcmask 891904
      %v223 = vsel %vm222, %v217, %v219
      %v224 = vsel %vm222, %v219, %v221
      %228 = vrot.lane.b32.xlu0 %v174, 108
      %v229 = vpop.permute.xlu0 %228
      %230 = vrot.lane.b32.xlu0 %v175, 108
      %v231 = vpop.permute.xlu0 %230
      %232 = vrot.lane.b32.xlu0 %v176, 108
      %v233 = vpop.permute.xlu0 %232
      %vm234 = vcmask 883712
      %v235 = vsel %vm234, %v229, %v231
      %v236 = vsel %vm234, %v231, %v233
      %240 = vrot.lane.b32.xlu0 %v174, 92
      %v241 = vpop.permute.xlu0 %240
      %242 = vrot.lane.b32.xlu0 %v175, 92
      %v243 = vpop.permute.xlu0 %242
      %244 = vrot.lane.b32.xlu0 %v176, 92
      %v245 = vpop.permute.xlu0 %244
      %vm246 = vcmask 752640
      %v247 = vsel %vm246, %v241, %v243
      %v248 = vsel %vm246, %v243, %v245
      %252 = vrot.lane.b32.xlu0 %v174, 91
      %v253 = vpop.permute.xlu0 %252
      %254 = vrot.lane.b32.xlu0 %v175, 91
      %v255 = vpop.permute.xlu0 %254
      %256 = vrot.lane.b32.xlu0 %v176, 91
      %v257 = vpop.permute.xlu0 %256
      %vm258 = vcmask 744448
      %v259 = vsel %vm258, %v253, %v255
      %v260 = vsel %vm258, %v255, %v257
      %264 = vrot.lane.b32.xlu0 %v174, 90
      %v265 = vpop.permute.xlu0 %264
      %266 = vrot.lane.b32.xlu0 %v175, 90
      %v267 = vpop.permute.xlu0 %266
      %268 = vrot.lane.b32.xlu0 %v176, 90
      %v269 = vpop.permute.xlu0 %268
      %vm270 = vcmask 736256
      %v271 = vsel %vm270, %v265, %v267
      %v272 = vsel %vm270, %v267, %v269
      %v276 = vpack.c.bf16 %v187, %v174
      %v277 = vpack.c.bf16 %v188, %v175
      %v278 = vpack.c.bf16 %v185, %v176
      %v279 = vpack.c.bf16 %v211, %v199
      %v280 = vpack.c.bf16 %v212, %v200
      %v281 = vpack.c.bf16 %v209, %v197
      %v282 = vpack.c.bf16 %v235, %v223
      %v283 = vpack.c.bf16 %v236, %v224
      %v284 = vpack.c.bf16 %v233, %v221
      %v285 = vpack.c.bf16 %v259, %v247
      %v286 = vpack.c.bf16 %v260, %v248
      %v287 = vpack.c.bf16 %v257, %v245
      %v288 = vpack.c.bf16 %v271, %v271
      %v289 = vpack.c.bf16 %v272, %v272
      %v290 = vpack.c.bf16 %v269, %v269
      %v291 = vld [vmem:[%s1] sm:$0xf]
      %v292 = vld [vmem:[%s1 + $0x4] sm:$0xf]
      %v293 = vld [vmem:[%s2] sm:$0xff]
      %v294 = vld [vmem:[%s2 + $0x8] sm:$0xff]
      %296 = vset.pattern.permute.xlu0 0
      %297 = vperm.xlu0 %296, %v293
      %v298 = vpop.permute.xlu0 %297
      %301 = vset.pattern.permute.xlu0 0
      %302 = vperm.xlu0 %301, %v294
      %v303 = vpop.permute.xlu0 %302
      %v307 = vunpack.c.l.b16 %v291
      %v308 = vunpack.c.l.b16 %v292
      %v309 = vpack.c.b16 %v308, %v307
      %vm310 = vcmask 588800
      %v312 = vsel %vm310, %v309, 0
      %vm314 = vcmask 1043456
      %v316 = vsel %vm314, %v288, 0
      %v319 = vsel %vm314, %v289, 0
      %v322 = vsel %vm314, %v290, 0
      %324 = vmatpush.bf16.msra.mxu0 0
      %325 = vmatpush.bf16.msra.mxu0 0
      %326 = vmatpush.bf16.msra.mxu0 0
      %327 = vmatpush.bf16.msra.mxu0 %v316
      %328 = vmatpush.bf16.msra.mxu0 %v285
      %329 = vmatpush.bf16.msra.mxu0 %v282
      %330 = vmatpush.bf16.msra.mxu0 %v279
      %331 = vmatpush.bf16.msra.mxu0 %v276
      %332 = vmatmul.bf16.gmra.mxu0 %v312
      %v333 = vpop.f32.mrf.mxu0
      %v334 = vadd.f32 %v298, %v333
      %v335 = vpop.f32.mrf.mxu0
      %v336 = vadd.f32 %v303, %v335
      %337 = vdwg.mxu0
      %338 = vmatpush.bf16.msra.mxu0 0
      %339 = vmatpush.bf16.msra.mxu0 0
      %340 = vmatpush.bf16.msra.mxu0 0
      %341 = vmatpush.bf16.msra.mxu0 %v319
      %342 = vmatpush.bf16.msra.mxu0 %v286
      %343 = vmatpush.bf16.msra.mxu0 %v283
      %344 = vmatpush.bf16.msra.mxu0 %v280
      %345 = vmatpush.bf16.msra.mxu0 %v277
      %346 = vmatmul.bf16.gmra.mxu0 %v312
      %v347 = vpop.f32.mrf.mxu0
      %v348 = vadd.f32 %v298, %v347
      %v349 = vpop.f32.mrf.mxu0
      %v350 = vadd.f32 %v303, %v349
      %351 = vdwg.mxu0
      %352 = vmatpush.bf16.msra.mxu0 0
      %353 = vmatpush.bf16.msra.mxu0 0
      %354 = vmatpush.bf16.msra.mxu0 0
      %355 = vmatpush.bf16.msra.mxu0 %v322
      %356 = vmatpush.bf16.msra.mxu0 %v287
      %357 = vmatpush.bf16.msra.mxu0 %v284
      %358 = vmatpush.bf16.msra.mxu0 %v281
      %359 = vmatpush.bf16.msra.mxu0 %v278
      %360 = vmatmul.bf16.gmra.mxu0 %v312
      %v361 = vpop.f32.mrf.mxu0
      %v362 = vadd.f32 %v298, %v361
      %v363 = vpop.f32.mrf.mxu0
      %v364 = vadd.f32 %v303, %v363
      %365 = vdwg.mxu0
      %v366 = vmax.f32 %v334, 0.0
      %v367 = vmax.f32 %v348, 0.0
      %v368 = vmax.f32 %v362, 0.0
      %v369 = vmax.f32 %v336, 0.0
      %v370 = vmax.f32 %v350, 0.0
      %v371 = vmax.f32 %v364, 0.0
      %v372 = vpack.c.bf16 %v367, %v366
      %v373 = vpack.c.bf16 %v368, %v368
      %v374 = vpack.c.bf16 %v370, %v369
      %v375 = vpack.c.bf16 %v371, %v371
      %376 = vst [vmem:[%s170] sm:$0xff] %v372
      %vm377 = vcmask 257024
      %378 = vst.msk [vmem:[%s170 + $0x8] sm:$0xf] %vm377, %v373
      %379 = vst [vmem:[%s170 + $0xc] sm:$0xff] %v374
      %380 = vst.msk [vmem:[%s170 + $0x14] sm:$0xf] %vm377, %v375
      %p381 = scmp.lt.s32.totalorder %s14, 1
      %s382 = scalar_select %p381, %s14, 1
      %s383 = smul.addr %s382, 6
      %s384 = smul.addr %s383, 4
      %s385 = scalar_lea.vmem %s3, %s384
      // Predicated region
      $region33: #{reduction_block_forward.7} parent=31 // pred_check
        %p386 = pneg %p100
      $region34: #{reduction_block_forward.7} parent=31 // pred_check_branch
        %388 = sbr.rel (%p386) target = $region36
      $region35: #{reduction_block_forward.7} parent=31 // pred_region
        _
      $region36: #{reduction_block_forward.7} parent=31 // pred_fallthru
        _
    $region32: #{reduction_block_forward.7} parent=5 // pred_fallthru
      _
    %p389 = scmp.le.s32.totalorder 2, %s9
    // Predicated region
    $region37: #{reduction_block_forward.7} parent=5 // pred_check
      %p390 = pneg %p389
    $region38: #{reduction_block_forward.7} parent=5 // pred_check_branch
      %392 = sbr.rel (%p390) target = $region40
    $region39: #{reduction_block_forward.7} parent=5 // pred_region
      %s393 = ssub.s32 %s9, 2
      // Predicated region
      $region41: #{reduction_block_forward.7} parent=39 // pred_check
        %p394 = pneg %p106
      $region42: #{reduction_block_forward.7} parent=39 // pred_check_branch
        %396 = sbr.rel (%p394) target = $region44
      $region43: #{reduction_block_forward.7} parent=39 // pred_region
        %p397 = scmp.lt.s32.totalorder %s15, 1
        %s398 = scalar_select %p397, %s15, 1
        %s399 = smul.addr %s398, 6
        %s400 = smul.addr %s399, 4
        %s401 = scalar_lea.vmem %s3, %s400
      $region44: #{reduction_block_forward.7} parent=39 // pred_fallthru
        _
    $region40: #{reduction_block_forward.7} parent=5 // pred_fallthru
      _
  $region6: #{reduction_block_forward.7} parent=0 // loop_footer
    %s13 = sadd.s32 1, %s9
  $region7: #{reduction_block_forward.7} parent=0 // loop_footer_branch
    %8 = sbr.rel target = $region3
  $region8: #{reduction_block_forward.7} parent=0 // loop_exit
    _

// kernel: reduction_block_forward.8
$region0: #{reduction_block_forward.8}
  #allocation0 [shape = 'u32[]', space=smem, size = 0x4, offset = 0x4, fixed_abs, tag = 'smem constant byte address 0x4 - core index']
  #allocation1 [shape = 'u32[72,128]{1,0:T(1,128)}', space=vmem, size = 0x9000, scoped, tag = 'internal scratch']
  %s0 = inlined_call_operand.vmem [shape: bf16[2,16,324], index: 0, kind: input, shape index: {}]
  %s1 = inlined_call_operand.vmem [shape: bf16[16,144], index: 1, kind: input, shape index: {}]
  %s2 = inlined_call_operand.vmem [shape: f32[16,1], index: 2, kind: input, shape index: {}]
  %s3 = inlined_call_operand.vmem [shape: f32[2,16,72], index: 3, kind: output, shape index: {}]
  %s4 = sld [smem:[#allocation0]]
  $region45: #{reduction_block_forward.8} parent=0
    _
  %s6 = ssub.s32 1, %s4
  %s7 = scalar_select 0, %s6, %s4
  loop: start=0, step=1, limit=4
  $region2: #{reduction_block_forward.8} parent=0 // loop_pre_header
    _
  $region3: #{reduction_block_forward.8} parent=0 // loop_header
    %s9 = sphi 0, %s13
    %p10 = scmp.ge.s32.totalorder %s9, 4
    %s19 = sphi 0, %s21
    %s22 = sphi 0, %s19
    %s23 = sphi 0, %s22
    %s39 = sphi 0, %s23
    %s43 = sphi 0, %s43
    %s45 = sphi 0, %s43
    %s46 = sphi 0, %s45
    %s60 = sphi 0, %s46
    %s64 = sphi 0, %s64
    %s66 = sphi 0, %s64
    %s67 = sphi 0, %s66
    %s81 = sphi 0, %s67
    %s87 = sphi 0, %s89
    %s90 = sphi 0, %s87
    %s91 = sphi 0, %s90
    %s107 = sphi 0, %s91
  $region4: #{reduction_block_forward.8} parent=0 // loop_header_branch
    %12 = sbr.rel (%p10) target = $region8
  $region5: #{reduction_block_forward.8} parent=0 // loop_body
    %s14 = ssub.s32 %s9, 1
    %s15 = ssub.s32 %s9, 2
    %s16 = sadd.s32 %s9, 1
    %s17 = ssub.s32 %s9, %s16
    %p18 = scmp.eq.s32.totalorder %s17, 0
    %s20 = sadd.s32 %s19, 1
    %s21 = scalar_select %p18, %s19, %s20
    %p24 = pneg %p18
    %p25 = scmp.eq.s32.totalorder %s9, 1
    %p26 = por %p24, %p25
    %p27 = scmp.ne.s32.totalorder %s19, %s22
    %p28 = scmp.eq.s32.totalorder %s9, 0
    %p29 = por %p27, %p28
    %p30 = scmp.ne.s32.totalorder %s19, %s22
    %p31 = scmp.eq.s32.totalorder %s14, 1
    %p32 = por %p30, %p31
    %p33 = scmp.ne.s32.totalorder %s22, %s23
    %p34 = scmp.eq.s32.totalorder %s14, 0
    %p35 = por %p33, %p34
    %p36 = scmp.ne.s32.totalorder %s22, %s23
    %p37 = scmp.eq.s32.totalorder %s15, 1
    %p38 = por %p36, %p37
    %p40 = scmp.ne.s32.totalorder %s23, %s39
    %p41 = scmp.eq.s32.totalorder %s15, 0
    %p42 = por %p40, %p41
    %s44 = sadd.s32 %s43, 1
    %p47 = scmp.eq.s32.totalorder %s9, 1
    %p48 = scmp.ne.s32.totalorder %s43, %s45
    %p49 = scmp.eq.s32.totalorder %s9, 0
    %p50 = por %p48, %p49
    %p51 = scmp.ne.s32.totalorder %s43, %s45
    %p52 = scmp.eq.s32.totalorder %s14, 1
    %p53 = por %p51, %p52
    %p54 = scmp.ne.s32.totalorder %s45, %s46
    %p55 = scmp.eq.s32.totalorder %s14, 0
    %p56 = por %p54, %p55
    %p57 = scmp.ne.s32.totalorder %s45, %s46
    %p58 = scmp.eq.s32.totalorder %s15, 1
    %p59 = por %p57, %p58
    %p61 = scmp.ne.s32.totalorder %s46, %s60
    %p62 = scmp.eq.s32.totalorder %s15, 0
    %p63 = por %p61, %p62
    %s65 = sadd.s32 %s64, 1
    %p68 = scmp.eq.s32.totalorder %s9, 1
    %p69 = scmp.ne.s32.totalorder %s64, %s66
    %p70 = scmp.eq.s32.totalorder %s9, 0
    %p71 = por %p69, %p70
    %p72 = scmp.ne.s32.totalorder %s64, %s66
    %p73 = scmp.eq.s32.totalorder %s14, 1
    %p74 = por %p72, %p73
    %p75 = scmp.ne.s32.totalorder %s66, %s67
    %p76 = scmp.eq.s32.totalorder %s14, 0
    %p77 = por %p75, %p76
    %p78 = scmp.ne.s32.totalorder %s66, %s67
    %p79 = scmp.eq.s32.totalorder %s15, 1
    %p80 = por %p78, %p79
    %p82 = scmp.ne.s32.totalorder %s67, %s81
    %p83 = scmp.eq.s32.totalorder %s15, 0
    %p84 = por %p82, %p83
    %s85 = ssub.s32 %s9, %s16
    %p86 = scmp.eq.s32.totalorder %s85, 0
    %s88 = sadd.s32 %s87, 1
    %s89 = scalar_select %p86, %s87, %s88
    %p92 = pneg %p86
    %p93 = scmp.eq.s32.totalorder %s9, 1
    %p94 = por %p92, %p93
    %p95 = scmp.ne.s32.totalorder %s87, %s90
    %p96 = scmp.eq.s32.totalorder %s9, 0
    %p97 = por %p95, %p96
    %p98 = scmp.ne.s32.totalorder %s87, %s90
    %p99 = scmp.eq.s32.totalorder %s14, 1
    %p100 = por %p98, %p99
    %p101 = scmp.ne.s32.totalorder %s90, %s91
    %p102 = scmp.eq.s32.totalorder %s14, 0
    %p103 = por %p101, %p102
    %p104 = scmp.ne.s32.totalorder %s90, %s91
    %p105 = scmp.eq.s32.totalorder %s15, 1
    %p106 = por %p104, %p105
    %p108 = scmp.ne.s32.totalorder %s91, %s107
    %p109 = scmp.eq.s32.totalorder %s15, 0
    %p110 = por %p108, %p109
    %p111 = scmp.le.s32.totalorder 1, %s9
    %p112 = scmp.lt.s32.totalorder %s9, 3
    %p113 = pnand %p111, %p112
    %p114 = pneg %p113
    // Predicated region
    $region9: #{reduction_block_forward.8} parent=5 // pred_check
      _
    $region10: #{reduction_block_forward.8} parent=5 // pred_check_branch
      %116 = sbr.rel (%p113) target = $region12
    $region11: #{reduction_block_forward.8} parent=5 // pred_region
      %s117 = ssub.s32 %s9, 1
      // Predicated region
      $region13: #{reduction_block_forward.8} parent=11 // pred_check
        %p118 = pneg %p56
      $region14: #{reduction_block_forward.8} parent=11 // pred_check_branch
        %120 = sbr.rel (%p118) target = $region16
      $region15: #{reduction_block_forward.8} parent=11 // pred_region
        _
      $region16: #{reduction_block_forward.8} parent=11 // pred_fallthru
        _
      // Predicated region
      $region17: #{reduction_block_forward.8} parent=11 // pred_check
        %p121 = pneg %p77
      $region18: #{reduction_block_forward.8} parent=11 // pred_check_branch
        %123 = sbr.rel (%p121) target = $region20
      $region19: #{reduction_block_forward.8} parent=11 // pred_region
        _
      $region20: #{reduction_block_forward.8} parent=11 // pred_fallthru
        _
    $region12: #{reduction_block_forward.8} parent=5 // pred_fallthru
      _
    %p124 = scmp.lt.s32.totalorder %s9, 2
    // Predicated region
    $region21: #{reduction_block_forward.8} parent=5 // pred_check
      %p125 = pneg %p124
    $region22: #{reduction_block_forward.8} parent=5 // pred_check_branch
      %127 = sbr.rel (%p125) target = $region24
    $region23: #{reduction_block_forward.8} parent=5 // pred_region
      // Predicated region
      $region25: #{reduction_block_forward.8} parent=23 // pred_check
        %p128 = pneg %p29
      $region26: #{reduction_block_forward.8} parent=23 // pred_check_branch
        %130 = sbr.rel (%p128) target = $region28
      $region27: #{reduction_block_forward.8} parent=23 // pred_region
        %p131 = scmp.lt.s32.totalorder %s9, 1
        %s132 = scalar_select %p131, %s9, 1
        %s133 = smul.addr %s132, 6
        %s134 = smul.addr %s133, 4
        %s135 = scalar_lea.vmem %s0, %s134
      $region28: #{reduction_block_forward.8} parent=23 // pred_fallthru
        _
    $region24: #{reduction_block_forward.8} parent=5 // pred_fallthru
      _
    %p136 = scmp.le.s32.totalorder 1, %s9
    %p137 = scmp.lt.s32.totalorder %s9, 3
    %p138 = pnand %p136, %p137
    %p139 = pneg %p138
    // Predicated region
    $region29: #{reduction_block_forward.8} parent=5 // pred_check
      _
    $region30: #{reduction_block_forward.8} parent=5 // pred_check_branch
      %141 = sbr.rel (%p138) target = $region32
    $region31: #{reduction_block_forward.8} parent=5 // pred_region
      %s142 = ssub.s32 %s9, 1
      %p143 = scmp.lt.s32.totalorder %s14, 1
      %s144 = scalar_select %p143, %s14, 1
      %s145 = smul.addr %s144, 6
      %s146 = smul.addr %s145, 4
      %s147 = scalar_lea.vmem %s0, %s146
      %p148 = pneg %p35
      %p149 = pneg %p32
      %p150 = pneg %p56
      %p151 = pneg %p53
      %p152 = pneg %p77
      %p153 = pneg %p74
      %p154 = pneg %p103
      %p155 = pneg %p100
      %p156 = scmp.lt.s32.totalorder %s14, 1
      %s157 = scalar_select %p156, %s14, 1
      %s158 = smul.addr %s157, 2
      %s159 = smul.addr %s158, 8
      %s160 = scalar_lea.vmem %s3, %s159
      %p161 = scmp.lt.s32.totalorder %s14, 1
      %s162 = scalar_select %p161, %s14, 1
      %s163 = smul.addr %s162, 6
      %s164 = smul.addr %s163, 4
      %s165 = scalar_lea.vmem %s0, %s164
      %p166 = scmp.lt.s32.totalorder %s14, 1
      %s167 = scalar_select %p166, %s14, 1
      %s168 = smul.addr %s167, 2
      %s169 = smul.addr %s168, 8
      %s170 = scalar_lea.vmem %s3, %s169
      %v172 = vld [vmem:[%s165] sm:$0xff]
      %v173 = vld [vmem:[%s165 + $0x8] sm:$0xf]
      %v174 = vld [vmem:[%s165 + $0xc] sm:$0xff]
      %v175 = vld [vmem:[%s165 + $0x14] sm:$0xf]
      %v176 = vunpack.c.l.bf16 %v172
      %v177 = vunpack.c.h.bf16 %v172
      %v178 = vunpack.c.l.bf16 %v173
      %v179 = vunpack.c.l.bf16 %v174
      %v180 = vunpack.c.h.bf16 %v174
      %v181 = vunpack.c.l.bf16 %v175
      %186 = vrot.lane.b32.xlu0 %v176, 47
      %v187 = vpop.permute.xlu0 %186
      %188 = vrot.lane.b32.xlu0 %v177, 47
      %v189 = vpop.permute.xlu0 %188
      %190 = vrot.lane.b32.xlu0 %v179, 47
      %v191 = vpop.permute.xlu0 %190
      %192 = vrot.lane.b32.xlu0 %v180, 47
      %v193 = vpop.permute.xlu0 %192
      %vm194 = vcmask 384000
      %v195 = vsel %vm194, %v187, %v189
      %v196 = vsel %vm194, %v191, %v193
      %199 = vrot.lane.b32.xlu0 %v176, 127
      %v200 = vpop.permute.xlu0 %199
      %201 = vrot.lane.b32.xlu0 %v179, 127
      %v202 = vpop.permute.xlu0 %201
      %205 = vrot.lane.b32.xlu0 %v177, 94
      %v206 = vpop.permute.xlu0 %205
      %207 = vrot.lane.b32.xlu0 %v180, 94
      %v208 = vpop.permute.xlu0 %207
      %213 = vrot.lane.b32.xlu0 %v177, 13
      %v214 = vpop.permute.xlu0 %213
      %215 = vrot.lane.b32.xlu0 %v178, 13
      %v216 = vpop.permute.xlu0 %215
      %217 = vrot.lane.b32.xlu0 %v180, 13
      %v218 = vpop.permute.xlu0 %217
      %219 = vrot.lane.b32.xlu0 %v181, 13
      %v220 = vpop.permute.xlu0 %219
      %vm221 = vcmask 105472
      %v222 = vsel %vm221, %v214, %v216
      %v223 = vsel %vm221, %v218, %v220
      %226 = vrot.lane.b32.xlu0 %v177, 93
      %v227 = vpop.permute.xlu0 %226
      %228 = vrot.lane.b32.xlu0 %v180, 93
      %v229 = vpop.permute.xlu0 %228
      %232 = vrot.lane.b32.xlu0 %v176, 119
      %v233 = vpop.permute.xlu0 %232
      %234 = vrot.lane.b32.xlu0 %v179, 119
      %v235 = vpop.permute.xlu0 %234
      %238 = vrot.lane.b32.xlu0 %v176, 38
      %v239 = vpop.permute.xlu0 %238
      %240 = vrot.lane.b32.xlu0 %v177, 38
      %v241 = vpop.permute.xlu0 %240
      %242 = vrot.lane.b32.xlu0 %v179, 38
      %v243 = vpop.permute.xlu0 %242
      %244 = vrot.lane.b32.xlu0 %v180, 38
      %v245 = vpop.permute.xlu0 %244
      %vm246 = vcmask 310272
      %v247 = vsel %vm246, %v239, %v241
      %v248 = vsel %vm246, %v243, %v245
      %251 = vrot.lane.b32.xlu0 %v176, 118
      %v252 = vpop.permute.xlu0 %251
      %253 = vrot.lane.b32.xlu0 %v179, 118
      %v254 = vpop.permute.xlu0 %253
      %v257 = vpack.c.bf16 %v179, %v176
      %v258 = vpack.c.bf16 %v196, %v195
      %v259 = vpack.c.bf16 %v202, %v200
      %v260 = vpack.c.bf16 %v208, %v206
      %v261 = vpack.c.bf16 %v223, %v222
      %v262 = vpack.c.bf16 %v229, %v227
      %v263 = vpack.c.bf16 %v235, %v233
      %v264 = vpack.c.bf16 %v248, %v247
      %v265 = vpack.c.bf16 %v254, %v252
      %v266 = vld [vmem:[%s1] sm:$0xff]
      %v267 = vld [vmem:[%s1 + $0x8] sm:$0xff]
      %v268 = vld [vmem:[%s2] sm:$0xff]
      %v269 = vld [vmem:[%s2 + $0x8] sm:$0xff]
      %271 = vset.pattern.permute.xlu0 0
      %272 = vperm.xlu0 %271, %v268
      %v273 = vpop.permute.xlu0 %272
      %276 = vset.pattern.permute.xlu0 0
      %277 = vperm.xlu0 %276, %v269
      %v278 = vpop.permute.xlu0 %277
      %v282 = vunpack.c.l.b16 %v266
      %v283 = vunpack.c.h.b16 %v266
      %v284 = vunpack.c.l.b16 %v267
      %v285 = vunpack.c.h.b16 %v267
      %v286 = vpack.c.b16 %v284, %v282
      %v287 = vpack.c.b16 %v285, %v283
      %vm289 = vcmask 130048
      %v291 = vsel %vm289, %v287, 0
      %293 = vmatpush.bf16.msra.mxu0 %v264
      %294 = vmatpush.bf16.msra.mxu0 %v263
      %295 = vmatpush.bf16.msra.mxu0 %v262
      %296 = vmatpush.bf16.msra.mxu0 %v261
      %297 = vmatpush.bf16.msra.mxu0 %v260
      %298 = vmatpush.bf16.msra.mxu0 %v259
      %299 = vmatpush.bf16.msra.mxu0 %v258
      %300 = vmatpush.bf16.msra.mxu0 %v257
      %301 = vmatmul.bf16.gmra.mxu0 %v286
      %v302 = vpop.f32.mrf.mxu0
      %v303 = vadd.f32 %v273, %v302
      %v304 = vpop.f32.mrf.mxu0
      %v305 = vadd.f32 %v278, %v304
      %306 = vdwg.mxu0
      %307 = vmatpush.bf16.msra.mxu0 0
      %308 = vmatpush.bf16.msra.mxu0 0
      %309 = vmatpush.bf16.msra.mxu0 0
      %310 = vmatpush.bf16.msra.mxu0 0
      %311 = vmatpush.bf16.msra.mxu0 0
      %312 = vmatpush.bf16.msra.mxu0 0
      %313 = vmatpush.bf16.msra.mxu0 0
      %314 = vmatpush.bf16.msra.mxu0 %v265
      %315 = vmatmul.bf16.gmra.mxu0 %v291
      %v316 = vpop.f32.mrf.mxu0
      %v317 = vadd.f32 %v303, %v316
      %v318 = vpop.f32.mrf.mxu0
      %v319 = vadd.f32 %v305, %v318
      %320 = vdwg.mxu0
      %v321 = vmax.f32 %v317, 0.0
      %v322 = vmax.f32 %v319, 0.0
      %vm323 = vcmask 588800
      %324 = vst.msk [vmem:[%s170] sm:$0xff] %vm323, %v321
      %325 = vst.msk [vmem:[%s170 + $0x8] sm:$0xff] %vm323, %v322
      %p326 = scmp.lt.s32.totalorder %s14, 1
      %s327 = scalar_select %p326, %s14, 1
      %s328 = smul.addr %s327, 2
      %s329 = smul.addr %s328, 8
      %s330 = scalar_lea.vmem %s3, %s329
      // Predicated region
      $region33: #{reduction_block_forward.8} parent=31 // pred_check
        %p331 = pneg %p100
      $region34: #{reduction_block_forward.8} parent=31 // pred_check_branch
        %333 = sbr.rel (%p331) target = $region36
      $region35: #{reduction_block_forward.8} parent=31 // pred_region
        _
      $region36: #{reduction_block_forward.8} parent=31 // pred_fallthru
        _
    $region32: #{reduction_block_forward.8} parent=5 // pred_fallthru
      _
    %p334 = scmp.le.s32.totalorder 2, %s9
    // Predicated region
    $region37: #{reduction_block_forward.8} parent=5 // pred_check
      %p335 = pneg %p334
    $region38: #{reduction_block_forward.8} parent=5 // pred_check_branch
      %337 = sbr.rel (%p335) target = $region40
    $region39: #{reduction_block_forward.8} parent=5 // pred_region
      %s338 = ssub.s32 %s9, 2
      // Predicated region
      $region41: #{reduction_block_forward.8} parent=39 // pred_check
        %p339 = pneg %p106
      $region42: #{reduction_block_forward.8} parent=39 // pred_check_branch
        %341 = sbr.rel (%p339) target = $region44
      $region43: #{reduction_block_forward.8} parent=39 // pred_region
        %p342 = scmp.lt.s32.totalorder %s15, 1
        %s343 = scalar_select %p342, %s15, 1
        %s344 = smul.addr %s343, 2
        %s345 = smul.addr %s344, 8
        %s346 = scalar_lea.vmem %s3, %s345
      $region44: #{reduction_block_forward.8} parent=39 // pred_fallthru
        _
    $region40: #{reduction_block_forward.8} parent=5 // pred_fallthru
      _
  $region6: #{reduction_block_forward.8} parent=0 // loop_footer
    %s13 = sadd.s32 1, %s9
  $region7: #{reduction_block_forward.8} parent=0 // loop_footer_branch
    %8 = sbr.rel target = $region3
  $region8: #{reduction_block_forward.8} parent=0 // loop_exit
    _

// kernel: reduction_block_forward.6
$region0: #{reduction_block_forward.6}
  #allocation0 [shape = 'u32[]', space=smem, size = 0x4, offset = 0x4, fixed_abs, tag = 'smem constant byte address 0x4 - core index']
  #allocation1 [shape = 'u32[72,128]{1,0:T(1,128)}', space=vmem, size = 0x9000, scoped, tag = 'internal scratch']
  %s0 = inlined_call_operand.vmem [shape: bf16[2,8,324], index: 0, kind: input, shape index: {}]
  %s1 = inlined_call_operand.vmem [shape: bf16[16,72], index: 1, kind: input, shape index: {}]
  %s2 = inlined_call_operand.vmem [shape: f32[16,1], index: 2, kind: input, shape index: {}]
  %s3 = inlined_call_operand.vmem [shape: f32[2,16,72], index: 3, kind: output, shape index: {}]
  %s4 = sld [smem:[#allocation0]]
  $region45: #{reduction_block_forward.6} parent=0
    _
  %s6 = ssub.s32 1, %s4
  %s7 = scalar_select 0, %s6, %s4
  loop: start=0, step=1, limit=4
  $region2: #{reduction_block_forward.6} parent=0 // loop_pre_header
    _
  $region3: #{reduction_block_forward.6} parent=0 // loop_header
    %s9 = sphi 0, %s13
    %p10 = scmp.ge.s32.totalorder %s9, 4
    %s19 = sphi 0, %s21
    %s22 = sphi 0, %s19
    %s23 = sphi 0, %s22
    %s39 = sphi 0, %s23
    %s43 = sphi 0, %s43
    %s45 = sphi 0, %s43
    %s46 = sphi 0, %s45
    %s60 = sphi 0, %s46
    %s64 = sphi 0, %s64
    %s66 = sphi 0, %s64
    %s67 = sphi 0, %s66
    %s81 = sphi 0, %s67
    %s87 = sphi 0, %s89
    %s90 = sphi 0, %s87
    %s91 = sphi 0, %s90
    %s107 = sphi 0, %s91
  $region4: #{reduction_block_forward.6} parent=0 // loop_header_branch
    %12 = sbr.rel (%p10) target = $region8
  $region5: #{reduction_block_forward.6} parent=0 // loop_body
    %s14 = ssub.s32 %s9, 1
    %s15 = ssub.s32 %s9, 2
    %s16 = sadd.s32 %s9, 1
    %s17 = ssub.s32 %s9, %s16
    %p18 = scmp.eq.s32.totalorder %s17, 0
    %s20 = sadd.s32 %s19, 1
    %s21 = scalar_select %p18, %s19, %s20
    %p24 = pneg %p18
    %p25 = scmp.eq.s32.totalorder %s9, 1
    %p26 = por %p24, %p25
    %p27 = scmp.ne.s32.totalorder %s19, %s22
    %p28 = scmp.eq.s32.totalorder %s9, 0
    %p29 = por %p27, %p28
    %p30 = scmp.ne.s32.totalorder %s19, %s22
    %p31 = scmp.eq.s32.totalorder %s14, 1
    %p32 = por %p30, %p31
    %p33 = scmp.ne.s32.totalorder %s22, %s23
    %p34 = scmp.eq.s32.totalorder %s14, 0
    %p35 = por %p33, %p34
    %p36 = scmp.ne.s32.totalorder %s22, %s23
    %p37 = scmp.eq.s32.totalorder %s15, 1
    %p38 = por %p36, %p37
    %p40 = scmp.ne.s32.totalorder %s23, %s39
    %p41 = scmp.eq.s32.totalorder %s15, 0
    %p42 = por %p40, %p41
    %s44 = sadd.s32 %s43, 1
    %p47 = scmp.eq.s32.totalorder %s9, 1
    %p48 = scmp.ne.s32.totalorder %s43, %s45
    %p49 = scmp.eq.s32.totalorder %s9, 0
    %p50 = por %p48, %p49
    %p51 = scmp.ne.s32.totalorder %s43, %s45
    %p52 = scmp.eq.s32.totalorder %s14, 1
    %p53 = por %p51, %p52
    %p54 = scmp.ne.s32.totalorder %s45, %s46
    %p55 = scmp.eq.s32.totalorder %s14, 0
    %p56 = por %p54, %p55
    %p57 = scmp.ne.s32.totalorder %s45, %s46
    %p58 = scmp.eq.s32.totalorder %s15, 1
    %p59 = por %p57, %p58
    %p61 = scmp.ne.s32.totalorder %s46, %s60
    %p62 = scmp.eq.s32.totalorder %s15, 0
    %p63 = por %p61, %p62
    %s65 = sadd.s32 %s64, 1
    %p68 = scmp.eq.s32.totalorder %s9, 1
    %p69 = scmp.ne.s32.totalorder %s64, %s66
    %p70 = scmp.eq.s32.totalorder %s9, 0
    %p71 = por %p69, %p70
    %p72 = scmp.ne.s32.totalorder %s64, %s66
    %p73 = scmp.eq.s32.totalorder %s14, 1
    %p74 = por %p72, %p73
    %p75 = scmp.ne.s32.totalorder %s66, %s67
    %p76 = scmp.eq.s32.totalorder %s14, 0
    %p77 = por %p75, %p76
    %p78 = scmp.ne.s32.totalorder %s66, %s67
    %p79 = scmp.eq.s32.totalorder %s15, 1
    %p80 = por %p78, %p79
    %p82 = scmp.ne.s32.totalorder %s67, %s81
    %p83 = scmp.eq.s32.totalorder %s15, 0
    %p84 = por %p82, %p83
    %s85 = ssub.s32 %s9, %s16
    %p86 = scmp.eq.s32.totalorder %s85, 0
    %s88 = sadd.s32 %s87, 1
    %s89 = scalar_select %p86, %s87, %s88
    %p92 = pneg %p86
    %p93 = scmp.eq.s32.totalorder %s9, 1
    %p94 = por %p92, %p93
    %p95 = scmp.ne.s32.totalorder %s87, %s90
    %p96 = scmp.eq.s32.totalorder %s9, 0
    %p97 = por %p95, %p96
    %p98 = scmp.ne.s32.totalorder %s87, %s90
    %p99 = scmp.eq.s32.totalorder %s14, 1
    %p100 = por %p98, %p99
    %p101 = scmp.ne.s32.totalorder %s90, %s91
    %p102 = scmp.eq.s32.totalorder %s14, 0
    %p103 = por %p101, %p102
    %p104 = scmp.ne.s32.totalorder %s90, %s91
    %p105 = scmp.eq.s32.totalorder %s15, 1
    %p106 = por %p104, %p105
    %p108 = scmp.ne.s32.totalorder %s91, %s107
    %p109 = scmp.eq.s32.totalorder %s15, 0
    %p110 = por %p108, %p109
    %p111 = scmp.le.s32.totalorder 1, %s9
    %p112 = scmp.lt.s32.totalorder %s9, 3
    %p113 = pnand %p111, %p112
    %p114 = pneg %p113
    // Predicated region
    $region9: #{reduction_block_forward.6} parent=5 // pred_check
      _
    $region10: #{reduction_block_forward.6} parent=5 // pred_check_branch
      %116 = sbr.rel (%p113) target = $region12
    $region11: #{reduction_block_forward.6} parent=5 // pred_region
      %s117 = ssub.s32 %s9, 1
      // Predicated region
      $region13: #{reduction_block_forward.6} parent=11 // pred_check
        %p118 = pneg %p56
      $region14: #{reduction_block_forward.6} parent=11 // pred_check_branch
        %120 = sbr.rel (%p118) target = $region16
      $region15: #{reduction_block_forward.6} parent=11 // pred_region
        _
      $region16: #{reduction_block_forward.6} parent=11 // pred_fallthru
        _
      // Predicated region
      $region17: #{reduction_block_forward.6} parent=11 // pred_check
        %p121 = pneg %p77
      $region18: #{reduction_block_forward.6} parent=11 // pred_check_branch
        %123 = sbr.rel (%p121) target = $region20
      $region19: #{reduction_block_forward.6} parent=11 // pred_region
        _
      $region20: #{reduction_block_forward.6} parent=11 // pred_fallthru
        _
    $region12: #{reduction_block_forward.6} parent=5 // pred_fallthru
      _
    %p124 = scmp.lt.s32.totalorder %s9, 2
    // Predicated region
    $region21: #{reduction_block_forward.6} parent=5 // pred_check
      %p125 = pneg %p124
    $region22: #{reduction_block_forward.6} parent=5 // pred_check_branch
      %127 = sbr.rel (%p125) target = $region24
    $region23: #{reduction_block_forward.6} parent=5 // pred_region
      // Predicated region
      $region25: #{reduction_block_forward.6} parent=23 // pred_check
        %p128 = pneg %p29
      $region26: #{reduction_block_forward.6} parent=23 // pred_check_branch
        %130 = sbr.rel (%p128) target = $region28
      $region27: #{reduction_block_forward.6} parent=23 // pred_region
        %p131 = scmp.lt.s32.totalorder %s9, 1
        %s132 = scalar_select %p131, %s9, 1
        %s133 = smul.addr %s132, 3
        %s134 = smul.addr %s133, 4
        %s135 = scalar_lea.vmem %s0, %s134
      $region28: #{reduction_block_forward.6} parent=23 // pred_fallthru
        _
    $region24: #{reduction_block_forward.6} parent=5 // pred_fallthru
      _
    %p136 = scmp.le.s32.totalorder 1, %s9
    %p137 = scmp.lt.s32.totalorder %s9, 3
    %p138 = pnand %p136, %p137
    %p139 = pneg %p138
    // Predicated region
    $region29: #{reduction_block_forward.6} parent=5 // pred_check
      _
    $region30: #{reduction_block_forward.6} parent=5 // pred_check_branch
      %141 = sbr.rel (%p138) target = $region32
    $region31: #{reduction_block_forward.6} parent=5 // pred_region
      %s142 = ssub.s32 %s9, 1
      %p143 = scmp.lt.s32.totalorder %s14, 1
      %s144 = scalar_select %p143, %s14, 1
      %s145 = smul.addr %s144, 3
      %s146 = smul.addr %s145, 4
      %s147 = scalar_lea.vmem %s0, %s146
      %p148 = pneg %p35
      %p149 = pneg %p32
      %p150 = pneg %p56
      %p151 = pneg %p53
      %p152 = pneg %p77
      %p153 = pneg %p74
      %p154 = pneg %p103
      %p155 = pneg %p100
      %p156 = scmp.lt.s32.totalorder %s14, 1
      %s157 = scalar_select %p156, %s14, 1
      %s158 = smul.addr %s157, 2
      %s159 = smul.addr %s158, 8
      %s160 = scalar_lea.vmem %s3, %s159
      %p161 = scmp.lt.s32.totalorder %s14, 1
      %s162 = scalar_select %p161, %s14, 1
      %s163 = smul.addr %s162, 3
      %s164 = smul.addr %s163, 4
      %s165 = scalar_lea.vmem %s0, %s164
      %p166 = scmp.lt.s32.totalorder %s14, 1
      %s167 = scalar_select %p166, %s14, 1
      %s168 = smul.addr %s167, 2
      %s169 = smul.addr %s168, 8
      %s170 = scalar_lea.vmem %s3, %s169
      %v172 = vld [vmem:[%s165] sm:$0xff]
      %v173 = vld [vmem:[%s165 + $0x8] sm:$0xf]
      %v174 = vunpack.c.l.bf16 %v172
      %v175 = vunpack.c.h.bf16 %v172
      %v176 = vunpack.c.l.bf16 %v173
      %179 = vrot.lane.b32.xlu0 %v174, 47
      %v180 = vpop.permute.xlu0 %179
      %181 = vrot.lane.b32.xlu0 %v175, 47
      %v182 = vpop.permute.xlu0 %181
      %vm183 = vcmask 384000
      %v184 = vsel %vm183, %v180, %v182
      %186 = vrot.lane.b32.xlu0 %v174, 127
      %v187 = vpop.permute.xlu0 %186
      %189 = vrot.lane.b32.xlu0 %v175, 94
      %v190 = vpop.permute.xlu0 %189
      %193 = vrot.lane.b32.xlu0 %v175, 13
      %v194 = vpop.permute.xlu0 %193
      %195 = vrot.lane.b32.xlu0 %v176, 13
      %v196 = vpop.permute.xlu0 %195
      %vm197 = vcmask 105472
      %v198 = vsel %vm197, %v194, %v196
      %200 = vrot.lane.b32.xlu0 %v175, 93
      %v201 = vpop.permute.xlu0 %200
      %203 = vrot.lane.b32.xlu0 %v174, 119
      %v204 = vpop.permute.xlu0 %203
      %206 = vrot.lane.b32.xlu0 %v174, 38
      %v207 = vpop.permute.xlu0 %206
      %208 = vrot.lane.b32.xlu0 %v175, 38
      %v209 = vpop.permute.xlu0 %208
      %vm210 = vcmask 310272
      %v211 = vsel %vm210, %v207, %v209
      %213 = vrot.lane.b32.xlu0 %v174, 118
      %v214 = vpop.permute.xlu0 %213
      %v216 = vpack.c.bf16 %v184, %v174
      %v217 = vpack.c.bf16 %v190, %v187
      %v218 = vpack.c.bf16 %v201, %v198
      %v219 = vpack.c.bf16 %v211, %v204
      %v220 = vpack.c.bf16 %v214, %v214
      %v221 = vld [vmem:[%s1] sm:$0xf]
      %v222 = vld [vmem:[%s1 + $0x4] sm:$0xf]
      %v223 = vld [vmem:[%s2] sm:$0xff]
      %v224 = vld [vmem:[%s2 + $0x8] sm:$0xff]
      %226 = vset.pattern.permute.xlu0 0
      %227 = vperm.xlu0 %226, %v223
      %v228 = vpop.permute.xlu0 %227
      %231 = vset.pattern.permute.xlu0 0
      %232 = vperm.xlu0 %231, %v224
      %v233 = vpop.permute.xlu0 %232
      %v237 = vunpack.c.l.b16 %v221
      %v238 = vunpack.c.l.b16 %v222
      %v239 = vpack.c.b16 %v238, %v237
      %vm240 = vcmask 588800
      %v242 = vsel %vm240, %v239, 0
      %vm244 = vcmask 1043456
      %v246 = vsel %vm244, %v220, 0
      %248 = vmatpush.bf16.msra.mxu0 0
      %249 = vmatpush.bf16.msra.mxu0 0
      %250 = vmatpush.bf16.msra.mxu0 0
      %251 = vmatpush.bf16.msra.mxu0 %v246
      %252 = vmatpush.bf16.msra.mxu0 %v219
      %253 = vmatpush.bf16.msra.mxu0 %v218
      %254 = vmatpush.bf16.msra.mxu0 %v217
      %255 = vmatpush.bf16.msra.mxu0 %v216
      %256 = vmatmul.bf16.gmra.mxu0 %v242
      %v257 = vpop.f32.mrf.mxu0
      %v258 = vadd.f32 %v228, %v257
      %v259 = vpop.f32.mrf.mxu0
      %v260 = vadd.f32 %v233, %v259
      %261 = vdwg.mxu0
      %v262 = vmax.f32 %v258, 0.0
      %v263 = vmax.f32 %v260, 0.0
      %264 = vst.msk [vmem:[%s170] sm:$0xff] %vm240, %v262
      %265 = vst.msk [vmem:[%s170 + $0x8] sm:$0xff] %vm240, %v263
      %p266 = scmp.lt.s32.totalorder %s14, 1
      %s267 = scalar_select %p266, %s14, 1
      %s268 = smul.addr %s267, 2
      %s269 = smul.addr %s268, 8
      %s270 = scalar_lea.vmem %s3, %s269
      // Predicated region
      $region33: #{reduction_block_forward.6} parent=31 // pred_check
        %p271 = pneg %p100
      $region34: #{reduction_block_forward.6} parent=31 // pred_check_branch
        %273 = sbr.rel (%p271) target = $region36
      $region35: #{reduction_block_forward.6} parent=31 // pred_region
        _
      $region36: #{reduction_block_forward.6} parent=31 // pred_fallthru
        _
    $region32: #{reduction_block_forward.6} parent=5 // pred_fallthru
      _
    %p274 = scmp.le.s32.totalorder 2, %s9
    // Predicated region
    $region37: #{reduction_block_forward.6} parent=5 // pred_check
      %p275 = pneg %p274
    $region38: #{reduction_block_forward.6} parent=5 // pred_check_branch
      %277 = sbr.rel (%p275) target = $region40
    $region39: #{reduction_block_forward.6} parent=5 // pred_region
      %s278 = ssub.s32 %s9, 2
      // Predicated region
      $region41: #{reduction_block_forward.6} parent=39 // pred_check
        %p279 = pneg %p106
      $region42: #{reduction_block_forward.6} parent=39 // pred_check_branch
        %281 = sbr.rel (%p279) target = $region44
      $region43: #{reduction_block_forward.6} parent=39 // pred_region
        %p282 = scmp.lt.s32.totalorder %s15, 1
        %s283 = scalar_select %p282, %s15, 1
        %s284 = smul.addr %s283, 2
        %s285 = smul.addr %s284, 8
        %s286 = scalar_lea.vmem %s3, %s285
      $region44: #{reduction_block_forward.6} parent=39 // pred_fallthru
        _
    $region40: #{reduction_block_forward.6} parent=5 // pred_fallthru
      _
  $region6: #{reduction_block_forward.6} parent=0 // loop_footer
    %s13 = sadd.s32 1, %s9
  $region7: #{reduction_block_forward.6} parent=0 // loop_footer_branch
    %8 = sbr.rel target = $region3
  $region8: #{reduction_block_forward.6} parent=0 // loop_exit
    _

</llo_original>
